<compile_context>
chip_gen: v7x
topology: tpu7x:2x2x1
jax: 0.10.0
libtpu: 0.0.40
codegen_flags: <defaults>
</compile_context>

<pallas_src>
import math
import numpy as np
import jax
import jax.numpy as jnp
from jax.experimental import pallas as pl
from jax.experimental.pallas import tpu as pltpu


# ----------------------------------------------------------------------------
# The fused kernel: one image per grid step.
# ----------------------------------------------------------------------------
def _net_kernel(x_ref, w1e_ref, w1o_ref, b1_ref, w2e_ref, w2o_ref, b2_ref,
                wf1_ref, bf1_ref, wf2_ref, bf2_ref, wf3_ref, bf3_ref,
                o_ref, s1_ref, s2_ref):
    f32 = jnp.float32

    # ---- conv1 (+bias, ReLU) and width-direction 2x2 pool -------------------
    # Three MXU matmuls (one per kernel row).  e1/o1 hold the even/odd output
    # columns, packed as lanes (col*6 + cout) -> width pool = elementwise max.
    e1 = jnp.zeros((30, 90), f32)
    o1 = jnp.zeros((30, 90), f32)
    for di in (0, 1, 2):
        xs = x_ref[0, pl.ds(di, 30), :]                                  # (30, 32)
        e1 = e1 + jnp.dot(xs, w1e_ref[di], preferred_element_type=f32)
        o1 = o1 + jnp.dot(xs, w1o_ref[di], preferred_element_type=f32)
    s1_ref[...] = jnp.maximum(jnp.maximum(e1, o1) + b1_ref[...], 0.0)    # (30, 90)

    # ---- conv2 (+bias, ReLU) and width pool ---------------------------------
    # The height pool of layer 1 is fused into the per-tap strided row reads.
    e2 = jnp.zeros((13, 96), f32)
    o2 = jnp.zeros((13, 96), f32)
    for di in (0, 1, 2):
        a = jnp.maximum(s1_ref[pl.ds(2 * di, 13, stride=2), :],
                        s1_ref[pl.ds(2 * di + 1, 13, stride=2), :])      # (13, 90)
        e2 = e2 + jnp.dot(a, w2e_ref[di], preferred_element_type=f32)
        o2 = o2 + jnp.dot(a, w2o_ref[di], preferred_element_type=f32)
    s2_ref[...] = jnp.maximum(jnp.maximum(e2, o2) + b2_ref[...], 0.0)    # (13, 96)

    # ---- fc1: height pool of layer 2 + CHW flatten folded into the weight ---
    h = bf1_ref[...]                                                     # (1, 120)
    for p in range(6):
        row = jnp.maximum(s2_ref[pl.ds(2 * p, 1), :],
                          s2_ref[pl.ds(2 * p + 1, 1), :])                # (1, 96)
        h = h + jnp.dot(row, wf1_ref[p], preferred_element_type=f32)
    h = jnp.maximum(h, 0.0)

    # ---- fc2 + ReLU, fc3 ----------------------------------------------------
    h = jnp.maximum(jnp.dot(h, wf2_ref[...], preferred_element_type=f32)
                    + bf2_ref[...], 0.0)                                 # (1, 84)
    o_ref[0] = jnp.dot(h, wf3_ref[...], preferred_element_type=f32) + bf3_ref[...]


# ----------------------------------------------------------------------------
# One-time host-side repack of PyTorch-layout parameters.
# ----------------------------------------------------------------------------
def pack_params(p):
    c1w = np.asarray(p["conv1_w"], np.float32)   # (6, 1, 3, 3)   OIHW
    c1b = np.asarray(p["conv1_b"], np.float32)
    c2w = np.asarray(p["conv2_w"], np.float32)   # (16, 6, 3, 3)
    c2b = np.asarray(p["conv2_b"], np.float32)
    f1w = np.asarray(p["fc1_w"], np.float32)     # (120, 576)
    f1b = np.asarray(p["fc1_b"], np.float32)
    f2w = np.asarray(p["fc2_w"], np.float32)     # (84, 120)
    f2b = np.asarray(p["fc2_b"], np.float32)
    f3w = np.asarray(p["fc3_w"], np.float32)     # (26, 84)
    f3b = np.asarray(p["fc3_b"], np.float32)

    # conv1: per kernel-row banded matrices, even/odd output columns split so
    # the width pool is an elementwise max.  Output lane = out_col*6 + cout.
    w1e = np.zeros((3, 32, 15 * 6), np.float32)
    w1o = np.zeros((3, 32, 15 * 6), np.float32)
    for di in range(3):
        for dj in range(3):
            for q in range(15):
                w1e[di, 2 * q + dj, q * 6:(q + 1) * 6] = c1w[:, 0, di, dj]
                w1o[di, 2 * q + 1 + dj, q * 6:(q + 1) * 6] = c1w[:, 0, di, dj]
    b1 = np.tile(c1b, 15).reshape(1, 90)

    # conv2: input lane = pool1_col*6 + cin, output lane = out_col*16 + cout.
    w2e = np.zeros((3, 15 * 6, 6 * 16), np.float32)
    w2o = np.zeros((3, 15 * 6, 6 * 16), np.float32)
    for di in range(3):
        for dj in range(3):
            blk = c2w[:, :, di, dj].T                     # (cin=6, cout=16)
            for q in range(6):
                re = (2 * q + dj) * 6
                ro = (2 * q + 1 + dj) * 6
                w2e[di, re:re + 6, q * 16:(q + 1) * 16] = blk
                w2o[di, ro:ro + 6, q * 16:(q + 1) * 16] = blk
    b2 = np.tile(c2b, 6).reshape(1, 96)

    # fc1: fold PyTorch's CHW flatten.  Kernel lane of pooled row p is
    # q*16 + cout; PyTorch feature index is cout*36 + p*6 + q.
    wf1 = np.zeros((6, 96, 120), np.float32)
    for pp in range(6):
        for q in range(6):
            for co in range(16):
                wf1[pp, q * 16 + co, :] = f1w[:, co * 36 + pp * 6 + q]
    bf1 = f1b.reshape(1, 120)

    wf2 = np.ascontiguousarray(f2w.T)            # (120, 84)
    bf2 = f2b.reshape(1, 84)
    wf3 = np.ascontiguousarray(f3w.T)            # (84, 26)
    bf3 = f3b.reshape(1, 26)

    arrs = (w1e, w1o, b1, w2e, w2o, b2, wf1, bf1, wf2, bf2, wf3, bf3)
    return tuple(jnp.asarray(a) for a in arrs)


# ----------------------------------------------------------------------------
# Forward pass: single fused pallas_call, grid over the batch.
# ----------------------------------------------------------------------------
def net_forward(x_nchw, packed):
    """x_nchw: (N, 1, 32, 32) float32 in PyTorch NCHW layout."""
    n = x_nchw.shape[0]
    x = x_nchw[:, 0, :, :]                          # Cin == 1 -> (N, 32, 32)
    zero3 = lambda i: (0, 0, 0)
    zero2 = lambda i: (0, 0)
    out = pl.pallas_call(
        _net_kernel,
        out_shape=jax.ShapeDtypeStruct((n, 1, 26), jnp.float32),
        grid=(n,),
        in_specs=[
            pl.BlockSpec((1, 32, 32), lambda i: (i, 0, 0)),   # image i
            pl.BlockSpec((3, 32, 90), zero3),                 # conv1 even cols
            pl.BlockSpec((3, 32, 90), zero3),                 # conv1 odd cols
            pl.BlockSpec((1, 90), zero2),                     # conv1 bias
            pl.BlockSpec((3, 90, 96), zero3),                 # conv2 even cols
            pl.BlockSpec((3, 90, 96), zero3),                 # conv2 odd cols
            pl.BlockSpec((1, 96), zero2),                     # conv2 bias
            pl.BlockSpec((6, 96, 120), zero3),                # fc1 (flatten folded)
            pl.BlockSpec((1, 120), zero2),                    # fc1 bias
            pl.BlockSpec((120, 84), zero2),                   # fc2
            pl.BlockSpec((1, 84), zero2),                     # fc2 bias
            pl.BlockSpec((84, 26), zero2),                    # fc3
            pl.BlockSpec((1, 26), zero2),                     # fc3 bias
        ],
        out_specs=pl.BlockSpec((1, 1, 26), lambda i: (i, 0, 0)),
        scratch_shapes=[pltpu.VMEM((30, 90), jnp.float32),    # relu(conv1), W-pooled cols
                        pltpu.VMEM((13, 96), jnp.float32)],   # relu(conv2), W-pooled cols
        compiler_params=pltpu.CompilerParams(
            dimension_semantics=("parallel",)),
    )(x, *packed)
    return out.reshape(n, 26)


# ----------------------------------------------------------------------------
# PyTorch-layout parameter init and a pure-JAX reference (verification only).
# ----------------------------------------------------------------------------
def init_params(key):
    ks = jax.random.split(key, 10)

    def u(k, shape, fan_in):
        b = 1.0 / math.sqrt(fan_in)
        return jax.random.uniform(k, shape, jnp.float32, -b, b)

    return dict(
        conv1_w=u(ks[0], (6, 1, 3, 3), 1 * 9),  conv1_b=u(ks[1], (6,), 1 * 9),
        conv2_w=u(ks[2], (16, 6, 3, 3), 6 * 9), conv2_b=u(ks[3], (16,), 6 * 9),
        fc1_w=u(ks[4], (120, 576), 576),        fc1_b=u(ks[5], (120,), 576),
        fc2_w=u(ks[6], (84, 120), 120),         fc2_b=u(ks[7], (84,), 120),
        fc3_w=u(ks[8], (26, 84), 84),           fc3_b=u(ks[9], (26,), 84),
    )


def ref_forward(x, p):
    def conv(x, w, b):
        y = jax.lax.conv_general_dilated(
            x, w, (1, 1), "VALID", dimension_numbers=("NCHW", "OIHW", "NCHW"))
        return y + b.reshape(1, -1, 1, 1)

    def pool(x):
        return jax.lax.reduce_window(x, -jnp.inf, jax.lax.max,
                                     (1, 1, 2, 2), (1, 1, 2, 2), "VALID")

    x = pool(jnp.maximum(conv(x, p["conv1_w"], p["conv1_b"]), 0.0))
    x = pool(jnp.maximum(conv(x, p["conv2_w"], p["conv2_b"]), 0.0))
    x = x.reshape(x.shape[0], -1)
    x = jnp.maximum(x @ p["fc1_w"].T + p["fc1_b"], 0.0)
    x = jnp.maximum(x @ p["fc2_w"].T + p["fc2_b"], 0.0)
    return x @ p["fc3_w"].T + p["fc3_b"]


if __name__ == "__main__":
    key = jax.random.PRNGKey(0)
    pkey, xkey = jax.random.split(key)
    params = init_params(pkey)
    packed = pack_params(params)          # one-time weight repack (host side)

    # fc1 = Linear(16*6*6, ...) implies 1x32x32 inputs (32->30->15->13->6).
    x = jax.random.normal(xkey, (2, 1, 32, 32), jnp.float32)

    fwd = jax.jit(net_forward)
    out = jax.block_until_ready(fwd(x, packed))
    assert out.shape == (2, 26) and out.dtype == jnp.float32

    ref = ref_forward(x, params)
    assert bool(jnp.allclose(out, ref, atol=3e-2, rtol=3e-2)), \
        float(jnp.max(jnp.abs(out - ref)))

    print("KERNEL_OK")
</pallas_src>

<mosaic_0001>
module attributes {stable_mosaic.version = 11 : i64} {
  func.func @_net_kernel(%arg0: i32, %arg1: memref<1x32x32xf32, #tpu.memory_space<vmem>>, %arg2: memref<3x32x90xf32, #tpu.memory_space<vmem>>, %arg3: memref<3x32x90xf32, #tpu.memory_space<vmem>>, %arg4: memref<1x90xf32, #tpu.memory_space<vmem>>, %arg5: memref<3x90x96xf32, #tpu.memory_space<vmem>>, %arg6: memref<3x90x96xf32, #tpu.memory_space<vmem>>, %arg7: memref<1x96xf32, #tpu.memory_space<vmem>>, %arg8: memref<6x96x120xf32, #tpu.memory_space<vmem>>, %arg9: memref<1x120xf32, #tpu.memory_space<vmem>>, %arg10: memref<120x84xf32, #tpu.memory_space<vmem>>, %arg11: memref<1x84xf32, #tpu.memory_space<vmem>>, %arg12: memref<84x26xf32, #tpu.memory_space<vmem>>, %arg13: memref<1x26xf32, #tpu.memory_space<vmem>>, %arg14: memref<1x1x26xf32, #tpu.memory_space<vmem>>, %arg15: memref<30x90xf32, #tpu.memory_space<vmem>>, %arg16: memref<13x96xf32, #tpu.memory_space<vmem>>) attributes {dimension_semantics = [#tpu.dimension_semantics<parallel>], iteration_bounds = array<i64: 2>, scalar_prefetch = 0 : i64, scratch_operands = 2 : i64, tpu.core_type = #tpu.core_type<tc>, window_params = [{transform_indices = @transform_0, window_bounds = array<i64: 1, 32, 32>}, {pipeline_mode = #tpu.pipeline_mode<synchronous>, transform_indices = @transform_1, window_bounds = array<i64: 3, 32, 90>}, {pipeline_mode = #tpu.pipeline_mode<synchronous>, transform_indices = @transform_2, window_bounds = array<i64: 3, 32, 90>}, {pipeline_mode = #tpu.pipeline_mode<synchronous>, transform_indices = @transform_3, window_bounds = array<i64: 1, 90>}, {pipeline_mode = #tpu.pipeline_mode<synchronous>, transform_indices = @transform_4, window_bounds = array<i64: 3, 90, 96>}, {pipeline_mode = #tpu.pipeline_mode<synchronous>, transform_indices = @transform_5, window_bounds = array<i64: 3, 90, 96>}, {pipeline_mode = #tpu.pipeline_mode<synchronous>, transform_indices = @transform_6, window_bounds = array<i64: 1, 96>}, {pipeline_mode = #tpu.pipeline_mode<synchronous>, transform_indices = @transform_7, window_bounds = array<i64: 6, 96, 120>}, {pipeline_mode = #tpu.pipeline_mode<synchronous>, transform_indices = @transform_8, window_bounds = array<i64: 1, 120>}, {pipeline_mode = #tpu.pipeline_mode<synchronous>, transform_indices = @transform_9, window_bounds = array<i64: 120, 84>}, {pipeline_mode = #tpu.pipeline_mode<synchronous>, transform_indices = @transform_10, window_bounds = array<i64: 1, 84>}, {pipeline_mode = #tpu.pipeline_mode<synchronous>, transform_indices = @transform_11, window_bounds = array<i64: 84, 26>}, {pipeline_mode = #tpu.pipeline_mode<synchronous>, transform_indices = @transform_12, window_bounds = array<i64: 1, 26>}, {transform_indices = @transform_13, window_bounds = array<i64: 1, 1, 26>}]} {
    %cst = arith.constant 0.000000e+00 : f32
    %0 = vector.broadcast %cst : f32 to vector<30x90xf32>
    %cst_0 = arith.constant 0.000000e+00 : f32
    %1 = vector.broadcast %cst_0 : f32 to vector<30x90xf32>
    %c0 = arith.constant 0 : index
    %c0_1 = arith.constant 0 : index
    %c0_2 = arith.constant 0 : index
    %2 = vector.load %arg1[%c0, %c0_1, %c0_2] : memref<1x32x32xf32, #tpu.memory_space<vmem>>, vector<1x30x32xf32>
    %3 = vector.shape_cast %2 : vector<1x30x32xf32> to vector<30x32xf32>
    %c0_3 = arith.constant 0 : index
    %c0_4 = arith.constant 0 : index
    %c0_5 = arith.constant 0 : index
    %4 = vector.load %arg2[%c0_3, %c0_4, %c0_5] : memref<3x32x90xf32, #tpu.memory_space<vmem>>, vector<1x32x90xf32>
    %5 = vector.shape_cast %4 : vector<1x32x90xf32> to vector<32x90xf32>
    %cst_6 = arith.constant dense<0.000000e+00> : vector<30x90xf32>
    %6 = tpu.matmul %3, %5, %cst_6 {dimension_numbers = #tpu.dot_dimension_numbers<[1], [0], [0], [1], [0, 0, 1, 1], [], []>} : vector<30x32xf32>, vector<32x90xf32>, vector<30x90xf32> -> vector<30x90xf32>
    %7 = arith.addf %0, %6 : vector<30x90xf32>
    %c0_7 = arith.constant 0 : index
    %c0_8 = arith.constant 0 : index
    %c0_9 = arith.constant 0 : index
    %8 = vector.load %arg3[%c0_7, %c0_8, %c0_9] : memref<3x32x90xf32, #tpu.memory_space<vmem>>, vector<1x32x90xf32>
    %9 = vector.shape_cast %8 : vector<1x32x90xf32> to vector<32x90xf32>
    %cst_10 = arith.constant dense<0.000000e+00> : vector<30x90xf32>
    %10 = tpu.matmul %3, %9, %cst_10 {dimension_numbers = #tpu.dot_dimension_numbers<[1], [0], [0], [1], [0, 0, 1, 1], [], []>} : vector<30x32xf32>, vector<32x90xf32>, vector<30x90xf32> -> vector<30x90xf32>
    %11 = arith.addf %1, %10 : vector<30x90xf32>
    %c0_11 = arith.constant 0 : index
    %c1 = arith.constant 1 : index
    %c0_12 = arith.constant 0 : index
    %12 = vector.load %arg1[%c0_11, %c1, %c0_12] : memref<1x32x32xf32, #tpu.memory_space<vmem>>, vector<1x30x32xf32>
    %13 = vector.shape_cast %12 : vector<1x30x32xf32> to vector<30x32xf32>
    %c1_13 = arith.constant 1 : index
    %c0_14 = arith.constant 0 : index
    %c0_15 = arith.constant 0 : index
    %14 = vector.load %arg2[%c1_13, %c0_14, %c0_15] : memref<3x32x90xf32, #tpu.memory_space<vmem>>, vector<1x32x90xf32>
    %15 = vector.shape_cast %14 : vector<1x32x90xf32> to vector<32x90xf32>
    %cst_16 = arith.constant dense<0.000000e+00> : vector<30x90xf32>
    %16 = tpu.matmul %13, %15, %cst_16 {dimension_numbers = #tpu.dot_dimension_numbers<[1], [0], [0], [1], [0, 0, 1, 1], [], []>} : vector<30x32xf32>, vector<32x90xf32>, vector<30x90xf32> -> vector<30x90xf32>
    %17 = arith.addf %7, %16 : vector<30x90xf32>
    %c1_17 = arith.constant 1 : index
    %c0_18 = arith.constant 0 : index
    %c0_19 = arith.constant 0 : index
    %18 = vector.load %arg3[%c1_17, %c0_18, %c0_19] : memref<3x32x90xf32, #tpu.memory_space<vmem>>, vector<1x32x90xf32>
    %19 = vector.shape_cast %18 : vector<1x32x90xf32> to vector<32x90xf32>
    %cst_20 = arith.constant dense<0.000000e+00> : vector<30x90xf32>
    %20 = tpu.matmul %13, %19, %cst_20 {dimension_numbers = #tpu.dot_dimension_numbers<[1], [0], [0], [1], [0, 0, 1, 1], [], []>} : vector<30x32xf32>, vector<32x90xf32>, vector<30x90xf32> -> vector<30x90xf32>
    %21 = arith.addf %11, %20 : vector<30x90xf32>
    %c0_21 = arith.constant 0 : index
    %c2 = arith.constant 2 : index
    %c0_22 = arith.constant 0 : index
    %22 = vector.load %arg1[%c0_21, %c2, %c0_22] : memref<1x32x32xf32, #tpu.memory_space<vmem>>, vector<1x30x32xf32>
    %23 = vector.shape_cast %22 : vector<1x30x32xf32> to vector<30x32xf32>
    %c2_23 = arith.constant 2 : index
    %c0_24 = arith.constant 0 : index
    %c0_25 = arith.constant 0 : index
    %24 = vector.load %arg2[%c2_23, %c0_24, %c0_25] : memref<3x32x90xf32, #tpu.memory_space<vmem>>, vector<1x32x90xf32>
    %25 = vector.shape_cast %24 : vector<1x32x90xf32> to vector<32x90xf32>
    %cst_26 = arith.constant dense<0.000000e+00> : vector<30x90xf32>
    %26 = tpu.matmul %23, %25, %cst_26 {dimension_numbers = #tpu.dot_dimension_numbers<[1], [0], [0], [1], [0, 0, 1, 1], [], []>} : vector<30x32xf32>, vector<32x90xf32>, vector<30x90xf32> -> vector<30x90xf32>
    %27 = arith.addf %17, %26 : vector<30x90xf32>
    %c2_27 = arith.constant 2 : index
    %c0_28 = arith.constant 0 : index
    %c0_29 = arith.constant 0 : index
    %28 = vector.load %arg3[%c2_27, %c0_28, %c0_29] : memref<3x32x90xf32, #tpu.memory_space<vmem>>, vector<1x32x90xf32>
    %29 = vector.shape_cast %28 : vector<1x32x90xf32> to vector<32x90xf32>
    %cst_30 = arith.constant dense<0.000000e+00> : vector<30x90xf32>
    %30 = tpu.matmul %23, %29, %cst_30 {dimension_numbers = #tpu.dot_dimension_numbers<[1], [0], [0], [1], [0, 0, 1, 1], [], []>} : vector<30x32xf32>, vector<32x90xf32>, vector<30x90xf32> -> vector<30x90xf32>
    %31 = arith.addf %21, %30 : vector<30x90xf32>
    %32 = arith.maximumf %27, %31 : vector<30x90xf32>
    %c0_31 = arith.constant 0 : index
    %c0_32 = arith.constant 0 : index
    %33 = vector.load %arg4[%c0_31, %c0_32] : memref<1x90xf32, #tpu.memory_space<vmem>>, vector<1x90xf32>
    %34 = vector.broadcast %33 : vector<1x90xf32> to vector<30x90xf32>
    %35 = arith.addf %32, %34 : vector<30x90xf32>
    %cst_33 = arith.constant 0.000000e+00 : f32
    %36 = vector.broadcast %cst_33 : f32 to vector<30x90xf32>
    %37 = arith.maximumf %35, %36 : vector<30x90xf32>
    %c0_34 = arith.constant 0 : index
    %c0_35 = arith.constant 0 : index
    %38 = vector.load %arg15[%c0_34, %c0_35] : memref<30x90xf32, #tpu.memory_space<vmem>>, vector<30x90xf32>
    tpu.vector_store %arg15[%c0_34, %c0_35], %37 {strides = array<i32>} : memref<30x90xf32, #tpu.memory_space<vmem>>, vector<30x90xf32>,
    %cst_36 = arith.constant 0.000000e+00 : f32
    %39 = vector.broadcast %cst_36 : f32 to vector<13x96xf32>
    %cst_37 = arith.constant 0.000000e+00 : f32
    %40 = vector.broadcast %cst_37 : f32 to vector<13x96xf32>
    %c0_38 = arith.constant 0 : index
    %c0_39 = arith.constant 0 : index
    %41 = tpu.strided_load %arg15[%c0_38, %c0_39] {strides = array<i32: 2, 1>} : memref<30x90xf32, #tpu.memory_space<vmem>>, vector<13x90xf32>
    %c1_40 = arith.constant 1 : index
    %c0_41 = arith.constant 0 : index
    %42 = tpu.strided_load %arg15[%c1_40, %c0_41] {strides = array<i32: 2, 1>} : memref<30x90xf32, #tpu.memory_space<vmem>>, vector<13x90xf32>
    %43 = arith.maximumf %41, %42 : vector<13x90xf32>
    %c0_42 = arith.constant 0 : index
    %c0_43 = arith.constant 0 : index
    %c0_44 = arith.constant 0 : index
    %44 = vector.load %arg5[%c0_42, %c0_43, %c0_44] : memref<3x90x96xf32, #tpu.memory_space<vmem>>, vector<1x90x96xf32>
    %45 = vector.shape_cast %44 : vector<1x90x96xf32> to vector<90x96xf32>
    %cst_45 = arith.constant dense<0.000000e+00> : vector<13x96xf32>
    %46 = tpu.matmul %43, %45, %cst_45 {dimension_numbers = #tpu.dot_dimension_numbers<[1], [0], [0], [1], [0, 0, 1, 1], [], []>} : vector<13x90xf32>, vector<90x96xf32>, vector<13x96xf32> -> vector<13x96xf32>
    %47 = arith.addf %39, %46 : vector<13x96xf32>
    %c0_46 = arith.constant 0 : index
    %c0_47 = arith.constant 0 : index
    %c0_48 = arith.constant 0 : index
    %48 = vector.load %arg6[%c0_46, %c0_47, %c0_48] : memref<3x90x96xf32, #tpu.memory_space<vmem>>, vector<1x90x96xf32>
    %49 = vector.shape_cast %48 : vector<1x90x96xf32> to vector<90x96xf32>
    %cst_49 = arith.constant dense<0.000000e+00> : vector<13x96xf32>
    %50 = tpu.matmul %43, %49, %cst_49 {dimension_numbers = #tpu.dot_dimension_numbers<[1], [0], [0], [1], [0, 0, 1, 1], [], []>} : vector<13x90xf32>, vector<90x96xf32>, vector<13x96xf32> -> vector<13x96xf32>
    %51 = arith.addf %40, %50 : vector<13x96xf32>
    %c2_50 = arith.constant 2 : index
    %c0_51 = arith.constant 0 : index
    %52 = tpu.strided_load %arg15[%c2_50, %c0_51] {strides = array<i32: 2, 1>} : memref<30x90xf32, #tpu.memory_space<vmem>>, vector<13x90xf32>
    %c3 = arith.constant 3 : index
    %c0_52 = arith.constant 0 : index
    %53 = tpu.strided_load %arg15[%c3, %c0_52] {strides = array<i32: 2, 1>} : memref<30x90xf32, #tpu.memory_space<vmem>>, vector<13x90xf32>
    %54 = arith.maximumf %52, %53 : vector<13x90xf32>
    %c1_53 = arith.constant 1 : index
    %c0_54 = arith.constant 0 : index
    %c0_55 = arith.constant 0 : index
    %55 = vector.load %arg5[%c1_53, %c0_54, %c0_55] : memref<3x90x96xf32, #tpu.memory_space<vmem>>, vector<1x90x96xf32>
    %56 = vector.shape_cast %55 : vector<1x90x96xf32> to vector<90x96xf32>
    %cst_56 = arith.constant dense<0.000000e+00> : vector<13x96xf32>
    %57 = tpu.matmul %54, %56, %cst_56 {dimension_numbers = #tpu.dot_dimension_numbers<[1], [0], [0], [1], [0, 0, 1, 1], [], []>} : vector<13x90xf32>, vector<90x96xf32>, vector<13x96xf32> -> vector<13x96xf32>
    %58 = arith.addf %47, %57 : vector<13x96xf32>
    %c1_57 = arith.constant 1 : index
    %c0_58 = arith.constant 0 : index
    %c0_59 = arith.constant 0 : index
    %59 = vector.load %arg6[%c1_57, %c0_58, %c0_59] : memref<3x90x96xf32, #tpu.memory_space<vmem>>, vector<1x90x96xf32>
    %60 = vector.shape_cast %59 : vector<1x90x96xf32> to vector<90x96xf32>
    %cst_60 = arith.constant dense<0.000000e+00> : vector<13x96xf32>
    %61 = tpu.matmul %54, %60, %cst_60 {dimension_numbers = #tpu.dot_dimension_numbers<[1], [0], [0], [1], [0, 0, 1, 1], [], []>} : vector<13x90xf32>, vector<90x96xf32>, vector<13x96xf32> -> vector<13x96xf32>
    %62 = arith.addf %51, %61 : vector<13x96xf32>
    %c4 = arith.constant 4 : index
    %c0_61 = arith.constant 0 : index
    %63 = tpu.strided_load %arg15[%c4, %c0_61] {strides = array<i32: 2, 1>} : memref<30x90xf32, #tpu.memory_space<vmem>>, vector<13x90xf32>
    %c5 = arith.constant 5 : index
    %c0_62 = arith.constant 0 : index
    %64 = tpu.strided_load %arg15[%c5, %c0_62] {strides = array<i32: 2, 1>} : memref<30x90xf32, #tpu.memory_space<vmem>>, vector<13x90xf32>
    %65 = arith.maximumf %63, %64 : vector<13x90xf32>
    %c2_63 = arith.constant 2 : index
    %c0_64 = arith.constant 0 : index
    %c0_65 = arith.constant 0 : index
    %66 = vector.load %arg5[%c2_63, %c0_64, %c0_65] : memref<3x90x96xf32, #tpu.memory_space<vmem>>, vector<1x90x96xf32>
    %67 = vector.shape_cast %66 : vector<1x90x96xf32> to vector<90x96xf32>
    %cst_66 = arith.constant dense<0.000000e+00> : vector<13x96xf32>
    %68 = tpu.matmul %65, %67, %cst_66 {dimension_numbers = #tpu.dot_dimension_numbers<[1], [0], [0], [1], [0, 0, 1, 1], [], []>} : vector<13x90xf32>, vector<90x96xf32>, vector<13x96xf32> -> vector<13x96xf32>
    %69 = arith.addf %58, %68 : vector<13x96xf32>
    %c2_67 = arith.constant 2 : index
    %c0_68 = arith.constant 0 : index
    %c0_69 = arith.constant 0 : index
    %70 = vector.load %arg6[%c2_67, %c0_68, %c0_69] : memref<3x90x96xf32, #tpu.memory_space<vmem>>, vector<1x90x96xf32>
    %71 = vector.shape_cast %70 : vector<1x90x96xf32> to vector<90x96xf32>
    %cst_70 = arith.constant dense<0.000000e+00> : vector<13x96xf32>
    %72 = tpu.matmul %65, %71, %cst_70 {dimension_numbers = #tpu.dot_dimension_numbers<[1], [0], [0], [1], [0, 0, 1, 1], [], []>} : vector<13x90xf32>, vector<90x96xf32>, vector<13x96xf32> -> vector<13x96xf32>
    %73 = arith.addf %62, %72 : vector<13x96xf32>
    %74 = arith.maximumf %69, %73 : vector<13x96xf32>
    %c0_71 = arith.constant 0 : index
    %c0_72 = arith.constant 0 : index
    %75 = vector.load %arg7[%c0_71, %c0_72] : memref<1x96xf32, #tpu.memory_space<vmem>>, vector<1x96xf32>
    %76 = vector.broadcast %75 : vector<1x96xf32> to vector<13x96xf32>
    %77 = arith.addf %74, %76 : vector<13x96xf32>
    %cst_73 = arith.constant 0.000000e+00 : f32
    %78 = vector.broadcast %cst_73 : f32 to vector<13x96xf32>
    %79 = arith.maximumf %77, %78 : vector<13x96xf32>
    %c0_74 = arith.constant 0 : index
    %c0_75 = arith.constant 0 : index
    %80 = vector.load %arg16[%c0_74, %c0_75] : memref<13x96xf32, #tpu.memory_space<vmem>>, vector<13x96xf32>
    tpu.vector_store %arg16[%c0_74, %c0_75], %79 {strides = array<i32>} : memref<13x96xf32, #tpu.memory_space<vmem>>, vector<13x96xf32>,
    %c0_76 = arith.constant 0 : index
    %c0_77 = arith.constant 0 : index
    %81 = vector.load %arg9[%c0_76, %c0_77] : memref<1x120xf32, #tpu.memory_space<vmem>>, vector<1x120xf32>
    %c0_78 = arith.constant 0 : index
    %c0_79 = arith.constant 0 : index
    %82 = vector.load %arg16[%c0_78, %c0_79] : memref<13x96xf32, #tpu.memory_space<vmem>>, vector<1x96xf32>
    %c1_80 = arith.constant 1 : index
    %c0_81 = arith.constant 0 : index
    %83 = vector.load %arg16[%c1_80, %c0_81] : memref<13x96xf32, #tpu.memory_space<vmem>>, vector<1x96xf32>
    %84 = arith.maximumf %82, %83 : vector<1x96xf32>
    %c0_82 = arith.constant 0 : index
    %c0_83 = arith.constant 0 : index
    %c0_84 = arith.constant 0 : index
    %85 = vector.load %arg8[%c0_82, %c0_83, %c0_84] : memref<6x96x120xf32, #tpu.memory_space<vmem>>, vector<1x96x120xf32>
    %86 = vector.shape_cast %85 : vector<1x96x120xf32> to vector<96x120xf32>
    %cst_85 = arith.constant dense<0.000000e+00> : vector<1x120xf32>
    %87 = tpu.matmul %84, %86, %cst_85 {dimension_numbers = #tpu.dot_dimension_numbers<[1], [0], [0], [1], [0, 0, 1, 1], [], []>} : vector<1x96xf32>, vector<96x120xf32>, vector<1x120xf32> -> vector<1x120xf32>
    %88 = arith.addf %81, %87 : vector<1x120xf32>
    %c2_86 = arith.constant 2 : index
    %c0_87 = arith.constant 0 : index
    %89 = vector.load %arg16[%c2_86, %c0_87] : memref<13x96xf32, #tpu.memory_space<vmem>>, vector<1x96xf32>
    %c3_88 = arith.constant 3 : index
    %c0_89 = arith.constant 0 : index
    %90 = vector.load %arg16[%c3_88, %c0_89] : memref<13x96xf32, #tpu.memory_space<vmem>>, vector<1x96xf32>
    %91 = arith.maximumf %89, %90 : vector<1x96xf32>
    %c1_90 = arith.constant 1 : index
    %c0_91 = arith.constant 0 : index
    %c0_92 = arith.constant 0 : index
    %92 = vector.load %arg8[%c1_90, %c0_91, %c0_92] : memref<6x96x120xf32, #tpu.memory_space<vmem>>, vector<1x96x120xf32>
    %93 = vector.shape_cast %92 : vector<1x96x120xf32> to vector<96x120xf32>
    %cst_93 = arith.constant dense<0.000000e+00> : vector<1x120xf32>
    %94 = tpu.matmul %91, %93, %cst_93 {dimension_numbers = #tpu.dot_dimension_numbers<[1], [0], [0], [1], [0, 0, 1, 1], [], []>} : vector<1x96xf32>, vector<96x120xf32>, vector<1x120xf32> -> vector<1x120xf32>
    %95 = arith.addf %88, %94 : vector<1x120xf32>
    %c4_94 = arith.constant 4 : index
    %c0_95 = arith.constant 0 : index
    %96 = vector.load %arg16[%c4_94, %c0_95] : memref<13x96xf32, #tpu.memory_space<vmem>>, vector<1x96xf32>
    %c5_96 = arith.constant 5 : index
    %c0_97 = arith.constant 0 : index
    %97 = vector.load %arg16[%c5_96, %c0_97] : memref<13x96xf32, #tpu.memory_space<vmem>>, vector<1x96xf32>
    %98 = arith.maximumf %96, %97 : vector<1x96xf32>
    %c2_98 = arith.constant 2 : index
    %c0_99 = arith.constant 0 : index
    %c0_100 = arith.constant 0 : index
    %99 = vector.load %arg8[%c2_98, %c0_99, %c0_100] : memref<6x96x120xf32, #tpu.memory_space<vmem>>, vector<1x96x120xf32>
    %100 = vector.shape_cast %99 : vector<1x96x120xf32> to vector<96x120xf32>
    %cst_101 = arith.constant dense<0.000000e+00> : vector<1x120xf32>
    %101 = tpu.matmul %98, %100, %cst_101 {dimension_numbers = #tpu.dot_dimension_numbers<[1], [0], [0], [1], [0, 0, 1, 1], [], []>} : vector<1x96xf32>, vector<96x120xf32>, vector<1x120xf32> -> vector<1x120xf32>
    %102 = arith.addf %95, %101 : vector<1x120xf32>
    %c6 = arith.constant 6 : index
    %c0_102 = arith.constant 0 : index
    %103 = vector.load %arg16[%c6, %c0_102] : memref<13x96xf32, #tpu.memory_space<vmem>>, vector<1x96xf32>
    %c7 = arith.constant 7 : index
    %c0_103 = arith.constant 0 : index
    %104 = vector.load %arg16[%c7, %c0_103] : memref<13x96xf32, #tpu.memory_space<vmem>>, vector<1x96xf32>
    %105 = arith.maximumf %103, %104 : vector<1x96xf32>
    %c3_104 = arith.constant 3 : index
    %c0_105 = arith.constant 0 : index
    %c0_106 = arith.constant 0 : index
    %106 = vector.load %arg8[%c3_104, %c0_105, %c0_106] : memref<6x96x120xf32, #tpu.memory_space<vmem>>, vector<1x96x120xf32>
    %107 = vector.shape_cast %106 : vector<1x96x120xf32> to vector<96x120xf32>
    %cst_107 = arith.constant dense<0.000000e+00> : vector<1x120xf32>
    %108 = tpu.matmul %105, %107, %cst_107 {dimension_numbers = #tpu.dot_dimension_numbers<[1], [0], [0], [1], [0, 0, 1, 1], [], []>} : vector<1x96xf32>, vector<96x120xf32>, vector<1x120xf32> -> vector<1x120xf32>
    %109 = arith.addf %102, %108 : vector<1x120xf32>
    %c8 = arith.constant 8 : index
    %c0_108 = arith.constant 0 : index
    %110 = vector.load %arg16[%c8, %c0_108] : memref<13x96xf32, #tpu.memory_space<vmem>>, vector<1x96xf32>
    %c9 = arith.constant 9 : index
    %c0_109 = arith.constant 0 : index
    %111 = vector.load %arg16[%c9, %c0_109] : memref<13x96xf32, #tpu.memory_space<vmem>>, vector<1x96xf32>
    %112 = arith.maximumf %110, %111 : vector<1x96xf32>
    %c4_110 = arith.constant 4 : index
    %c0_111 = arith.constant 0 : index
    %c0_112 = arith.constant 0 : index
    %113 = vector.load %arg8[%c4_110, %c0_111, %c0_112] : memref<6x96x120xf32, #tpu.memory_space<vmem>>, vector<1x96x120xf32>
    %114 = vector.shape_cast %113 : vector<1x96x120xf32> to vector<96x120xf32>
    %cst_113 = arith.constant dense<0.000000e+00> : vector<1x120xf32>
    %115 = tpu.matmul %112, %114, %cst_113 {dimension_numbers = #tpu.dot_dimension_numbers<[1], [0], [0], [1], [0, 0, 1, 1], [], []>} : vector<1x96xf32>, vector<96x120xf32>, vector<1x120xf32> -> vector<1x120xf32>
    %116 = arith.addf %109, %115 : vector<1x120xf32>
    %c10 = arith.constant 10 : index
    %c0_114 = arith.constant 0 : index
    %117 = vector.load %arg16[%c10, %c0_114] : memref<13x96xf32, #tpu.memory_space<vmem>>, vector<1x96xf32>
    %c11 = arith.constant 11 : index
    %c0_115 = arith.constant 0 : index
    %118 = vector.load %arg16[%c11, %c0_115] : memref<13x96xf32, #tpu.memory_space<vmem>>, vector<1x96xf32>
    %119 = arith.maximumf %117, %118 : vector<1x96xf32>
    %c5_116 = arith.constant 5 : index
    %c0_117 = arith.constant 0 : index
    %c0_118 = arith.constant 0 : index
    %120 = vector.load %arg8[%c5_116, %c0_117, %c0_118] : memref<6x96x120xf32, #tpu.memory_space<vmem>>, vector<1x96x120xf32>
    %121 = vector.shape_cast %120 : vector<1x96x120xf32> to vector<96x120xf32>
    %cst_119 = arith.constant dense<0.000000e+00> : vector<1x120xf32>
    %122 = tpu.matmul %119, %121, %cst_119 {dimension_numbers = #tpu.dot_dimension_numbers<[1], [0], [0], [1], [0, 0, 1, 1], [], []>} : vector<1x96xf32>, vector<96x120xf32>, vector<1x120xf32> -> vector<1x120xf32>
    %123 = arith.addf %116, %122 : vector<1x120xf32>
    %cst_120 = arith.constant 0.000000e+00 : f32
    %124 = vector.broadcast %cst_120 : f32 to vector<1x120xf32>
    %125 = arith.maximumf %123, %124 : vector<1x120xf32>
    %c0_121 = arith.constant 0 : index
    %c0_122 = arith.constant 0 : index
    %126 = vector.load %arg10[%c0_121, %c0_122] : memref<120x84xf32, #tpu.memory_space<vmem>>, vector<120x84xf32>
    %cst_123 = arith.constant dense<0.000000e+00> : vector<1x84xf32>
    %127 = tpu.matmul %125, %126, %cst_123 {dimension_numbers = #tpu.dot_dimension_numbers<[1], [0], [0], [1], [0, 0, 1, 1], [], []>} : vector<1x120xf32>, vector<120x84xf32>, vector<1x84xf32> -> vector<1x84xf32>
    %c0_124 = arith.constant 0 : index
    %c0_125 = arith.constant 0 : index
    %128 = vector.load %arg11[%c0_124, %c0_125] : memref<1x84xf32, #tpu.memory_space<vmem>>, vector<1x84xf32>
    %129 = arith.addf %127, %128 : vector<1x84xf32>
    %cst_126 = arith.constant 0.000000e+00 : f32
    %130 = vector.broadcast %cst_126 : f32 to vector<1x84xf32>
    %131 = arith.maximumf %129, %130 : vector<1x84xf32>
    %c0_127 = arith.constant 0 : index
    %c0_128 = arith.constant 0 : index
    %132 = vector.load %arg12[%c0_127, %c0_128] : memref<84x26xf32, #tpu.memory_space<vmem>>, vector<84x26xf32>
    %cst_129 = arith.constant dense<0.000000e+00> : vector<1x26xf32>
    %133 = tpu.matmul %131, %132, %cst_129 {dimension_numbers = #tpu.dot_dimension_numbers<[1], [0], [0], [1], [0, 0, 1, 1], [], []>} : vector<1x84xf32>, vector<84x26xf32>, vector<1x26xf32> -> vector<1x26xf32>
    %c0_130 = arith.constant 0 : index
    %c0_131 = arith.constant 0 : index
    %134 = vector.load %arg13[%c0_130, %c0_131] : memref<1x26xf32, #tpu.memory_space<vmem>>, vector<1x26xf32>
    %135 = arith.addf %133, %134 : vector<1x26xf32>
    %c0_132 = arith.constant 0 : index
    %c0_133 = arith.constant 0 : index
    %c0_134 = arith.constant 0 : index
    %136 = vector.load %arg14[%c0_132, %c0_133, %c0_134] : memref<1x1x26xf32, #tpu.memory_space<vmem>>, vector<1x1x26xf32>
    %137 = vector.shape_cast %136 : vector<1x1x26xf32> to vector<1x26xf32>
    %138 = vector.shape_cast %135 : vector<1x26xf32> to vector<1x1x26xf32>
    tpu.vector_store %arg14[%c0_132, %c0_133, %c0_134], %138 {strides = array<i32>} : memref<1x1x26xf32, #tpu.memory_space<vmem>>, vector<1x1x26xf32>,
    return
  }
  func.func @transform_0(%arg0: i32) -> (i32, i32, i32) {
    %c0_i32 = arith.constant 0 : i32
    %c0_i32_0 = arith.constant 0 : i32
    %c0_i32_1 = arith.constant 0 : i32
    return %arg0, %c0_i32, %c0_i32_0 : i32, i32, i32
  }
  func.func @transform_1(%arg0: i32) -> (i32, i32, i32) {
    %c0_i32 = arith.constant 0 : i32
    %c0_i32_0 = arith.constant 0 : i32
    %c0_i32_1 = arith.constant 0 : i32
    %c0_i32_2 = arith.constant 0 : i32
    return %c0_i32, %c0_i32_0, %c0_i32_1 : i32, i32, i32
  }
  func.func @transform_2(%arg0: i32) -> (i32, i32, i32) {
    %c0_i32 = arith.constant 0 : i32
    %c0_i32_0 = arith.constant 0 : i32
    %c0_i32_1 = arith.constant 0 : i32
    %c0_i32_2 = arith.constant 0 : i32
    return %c0_i32, %c0_i32_0, %c0_i32_1 : i32, i32, i32
  }
  func.func @transform_3(%arg0: i32) -> (i32, i32) {
    %c0_i32 = arith.constant 0 : i32
    %c0_i32_0 = arith.constant 0 : i32
    %c0_i32_1 = arith.constant 0 : i32
    return %c0_i32, %c0_i32_0 : i32, i32
  }
  func.func @transform_4(%arg0: i32) -> (i32, i32, i32) {
    %c0_i32 = arith.constant 0 : i32
    %c0_i32_0 = arith.constant 0 : i32
    %c0_i32_1 = arith.constant 0 : i32
    %c0_i32_2 = arith.constant 0 : i32
    return %c0_i32, %c0_i32_0, %c0_i32_1 : i32, i32, i32
  }
  func.func @transform_5(%arg0: i32) -> (i32, i32, i32) {
    %c0_i32 = arith.constant 0 : i32
    %c0_i32_0 = arith.constant 0 : i32
    %c0_i32_1 = arith.constant 0 : i32
    %c0_i32_2 = arith.constant 0 : i32
    return %c0_i32, %c0_i32_0, %c0_i32_1 : i32, i32, i32
  }
  func.func @transform_6(%arg0: i32) -> (i32, i32) {
    %c0_i32 = arith.constant 0 : i32
    %c0_i32_0 = arith.constant 0 : i32
    %c0_i32_1 = arith.constant 0 : i32
    return %c0_i32, %c0_i32_0 : i32, i32
  }
  func.func @transform_7(%arg0: i32) -> (i32, i32, i32) {
    %c0_i32 = arith.constant 0 : i32
    %c0_i32_0 = arith.constant 0 : i32
    %c0_i32_1 = arith.constant 0 : i32
    %c0_i32_2 = arith.constant 0 : i32
    return %c0_i32, %c0_i32_0, %c0_i32_1 : i32, i32, i32
  }
  func.func @transform_8(%arg0: i32) -> (i32, i32) {
    %c0_i32 = arith.constant 0 : i32
    %c0_i32_0 = arith.constant 0 : i32
    %c0_i32_1 = arith.constant 0 : i32
    return %c0_i32, %c0_i32_0 : i32, i32
  }
  func.func @transform_9(%arg0: i32) -> (i32, i32) {
    %c0_i32 = arith.constant 0 : i32
    %c0_i32_0 = arith.constant 0 : i32
    %c0_i32_1 = arith.constant 0 : i32
    return %c0_i32, %c0_i32_0 : i32, i32
  }
  func.func @transform_10(%arg0: i32) -> (i32, i32) {
    %c0_i32 = arith.constant 0 : i32
    %c0_i32_0 = arith.constant 0 : i32
    %c0_i32_1 = arith.constant 0 : i32
    return %c0_i32, %c0_i32_0 : i32, i32
  }
  func.func @transform_11(%arg0: i32) -> (i32, i32) {
    %c0_i32 = arith.constant 0 : i32
    %c0_i32_0 = arith.constant 0 : i32
    %c0_i32_1 = arith.constant 0 : i32
    return %c0_i32, %c0_i32_0 : i32, i32
  }
  func.func @transform_12(%arg0: i32) -> (i32, i32) {
    %c0_i32 = arith.constant 0 : i32
    %c0_i32_0 = arith.constant 0 : i32
    %c0_i32_1 = arith.constant 0 : i32
    return %c0_i32, %c0_i32_0 : i32, i32
  }
  func.func @transform_13(%arg0: i32) -> (i32, i32, i32) {
    %c0_i32 = arith.constant 0 : i32
    %c0_i32_0 = arith.constant 0 : i32
    %c0_i32_1 = arith.constant 0 : i32
    return %arg0, %c0_i32, %c0_i32_0 : i32, i32, i32
  }
}

</mosaic_0001>

<llo_original>
// kernel: net_forward.1
$region0: #{net_forward.1}
  #allocation0 [shape = 'u32[]', space=smem, size = 0x4, offset = 0x4, fixed_abs, tag = 'smem constant byte address 0x4 - core index']
  #allocation1 [shape = 'u32[144,128]{1,0:T(1,128)}', space=vmem, size = 0x12000, scoped, tag = 'internal scratch']
  #allocation2 [shape = 'f32[30,90]{1,0:T(8,128)}', space=vmem, size = 0x4000, scoped, tag = 'scratch operand']
  #allocation3 [shape = 'f32[13,96]{1,0:T(8,128)}', space=vmem, size = 0x2000, scoped, tag = 'scratch operand']
  %s0 = inlined_call_operand.hbm [shape: f32[2,32,32], index: 0, kind: input, shape index: {}]
  %s1 = inlined_call_operand.hbm [shape: f32[3,32,90], index: 1, kind: input, shape index: {}]
  %s2 = inlined_call_operand.hbm [shape: f32[3,32,90], index: 2, kind: input, shape index: {}]
  %s3 = inlined_call_operand.vmem [shape: f32[1,90], index: 3, kind: input, shape index: {}]
  %s4 = inlined_call_operand.vmem [shape: f32[3,90,96], index: 4, kind: input, shape index: {}]
  %s5 = inlined_call_operand.hbm [shape: f32[3,90,96], index: 5, kind: input, shape index: {}]
  %s6 = inlined_call_operand.vmem [shape: f32[1,96], index: 6, kind: input, shape index: {}]
  %s7 = inlined_call_operand.hbm [shape: f32[6,96,120], index: 7, kind: input, shape index: {}]
  %s8 = inlined_call_operand.vmem [shape: f32[1,120], index: 8, kind: input, shape index: {}]
  %s9 = inlined_call_operand.vmem [shape: f32[120,84], index: 9, kind: input, shape index: {}]
  %s10 = inlined_call_operand.vmem [shape: f32[1,84], index: 10, kind: input, shape index: {}]
  %s11 = inlined_call_operand.vmem [shape: f32[84,26], index: 11, kind: input, shape index: {}]
  %s12 = inlined_call_operand.vmem [shape: f32[1,26], index: 12, kind: input, shape index: {}]
  %s13 = inlined_call_operand.hbm [shape: f32[2,1,26], index: 13, kind: output, shape index: {}]
  %s14 = sld [smem:[#allocation0]]
  $region105: #{net_forward.1} parent=0
    _
  %s16 = ssub.s32 1, %s14
  %s17 = scalar_select 0, %s16, %s14
  $region1: #{net_forward.1} parent=0
    #allocation4 [shape = 'u8[32768]{0}', space=vmem, size = 0x8000, scoped, tag = 'input window, operand 0']
    #allocation5 [shape = 's32[2]{0}', space=sflag, size = 0x8, scoped, tag = 'scoped memory for net_forward.1']
    #allocation6 [shape = 's32[2]{0}', space=sflag, size = 0x8, scoped, tag = 'scoped memory for net_forward.1']
    #allocation7 [shape = 'u8[49152]{0}', space=vmem, size = 0xc000, scoped, tag = 'input window, operand 1, single buffered']
    #allocation8 [shape = 's32[1]{0}', space=sflag, size = 0x4, scoped, tag = 'scoped memory for net_forward.1']
    #allocation9 [shape = 'u8[49152]{0}', space=vmem, size = 0xc000, scoped, tag = 'input window, operand 2, single buffered']
    #allocation10 [shape = 'u8[147456]{0}', space=vmem, size = 0x24000, scoped, tag = 'input window, operand 5, single buffered']
    #allocation11 [shape = 's32[1]{0}', space=sflag, size = 0x4, scoped, tag = 'scoped memory for net_forward.1']
    #allocation12 [shape = 'u8[294912]{0}', space=vmem, size = 0x48000, scoped, tag = 'input window, operand 7, single buffered']
    #allocation13 [shape = 'u8[1024]{0}', space=vmem, size = 0x400, scoped, tag = 'output window, operand 0']
    %18 = vsyncpa [#allocation5], 0
    %s19 = scalar_lea.sflag [#allocation5], 1
    %20 = vsyncpa %s19, 0
    %21 = vsyncpa [#allocation8], 0
    %22 = vsyncpa [#allocation11], 0
    %23 = vsyncpa [#allocation6], 0
    %s24 = scalar_lea.sflag [#allocation6], 1
    %25 = vsyncpa %s24, 0
    loop: start=0, step=1, limit=4
    $region2: #{net_forward.1} parent=1 // loop_pre_header
      _
    $region3: #{net_forward.1} parent=1 // loop_header
      %s27 = sphi 0, %s31
      %p28 = scmp.ge.s32.totalorder %s27, 4
      %s37 = sphi 0, %s39
      %s40 = sphi 0, %s37
      %s41 = sphi 0, %s40
      %s57 = sphi 0, %s41
      %s61 = sphi 0, %s61
      %s63 = sphi 0, %s61
      %s64 = sphi 0, %s63
      %s78 = sphi 0, %s64
      %s82 = sphi 0, %s82
      %s84 = sphi 0, %s82
      %s85 = sphi 0, %s84
      %s99 = sphi 0, %s85
      %s103 = sphi 0, %s103
      %s105 = sphi 0, %s103
      %s106 = sphi 0, %s105
      %s120 = sphi 0, %s106
      %s124 = sphi 0, %s124
      %s126 = sphi 0, %s124
      %s127 = sphi 0, %s126
      %s141 = sphi 0, %s127
      %s145 = sphi 0, %s145
      %s147 = sphi 0, %s145
      %s148 = sphi 0, %s147
      %s162 = sphi 0, %s148
      %s166 = sphi 0, %s166
      %s168 = sphi 0, %s166
      %s169 = sphi 0, %s168
      %s183 = sphi 0, %s169
      %s187 = sphi 0, %s187
      %s189 = sphi 0, %s187
      %s190 = sphi 0, %s189
      %s204 = sphi 0, %s190
      %s208 = sphi 0, %s208
      %s210 = sphi 0, %s208
      %s211 = sphi 0, %s210
      %s225 = sphi 0, %s211
      %s229 = sphi 0, %s229
      %s231 = sphi 0, %s229
      %s232 = sphi 0, %s231
      %s246 = sphi 0, %s232
      %s250 = sphi 0, %s250
      %s252 = sphi 0, %s250
      %s253 = sphi 0, %s252
      %s267 = sphi 0, %s253
      %s271 = sphi 0, %s271
      %s273 = sphi 0, %s271
      %s274 = sphi 0, %s273
      %s288 = sphi 0, %s274
      %s292 = sphi 0, %s292
      %s294 = sphi 0, %s292
      %s295 = sphi 0, %s294
      %s309 = sphi 0, %s295
      %s315 = sphi 0, %s317
      %s318 = sphi 0, %s315
      %s319 = sphi 0, %s318
      %s335 = sphi 0, %s319
    $region4: #{net_forward.1} parent=1 // loop_header_branch
      %30 = sbr.rel (%p28) target = $region8
    $region5: #{net_forward.1} parent=1 // loop_body
      %s32 = ssub.s32 %s27, 1
      %s33 = ssub.s32 %s27, 2
      %s34 = sadd.s32 %s27, 1
      %s35 = ssub.s32 %s27, %s34
      %p36 = scmp.eq.s32.totalorder %s35, 0
      %s38 = sadd.s32 %s37, 1
      %s39 = scalar_select %p36, %s37, %s38
      %p42 = pneg %p36
      %p43 = scmp.eq.s32.totalorder %s27, 1
      %p44 = por %p42, %p43
      %p45 = scmp.ne.s32.totalorder %s37, %s40
      %p46 = scmp.eq.s32.totalorder %s27, 0
      %p47 = por %p45, %p46
      %p48 = scmp.ne.s32.totalorder %s37, %s40
      %p49 = scmp.eq.s32.totalorder %s32, 1
      %p50 = por %p48, %p49
      %p51 = scmp.ne.s32.totalorder %s40, %s41
      %p52 = scmp.eq.s32.totalorder %s32, 0
      %p53 = por %p51, %p52
      %p54 = scmp.ne.s32.totalorder %s40, %s41
      %p55 = scmp.eq.s32.totalorder %s33, 1
      %p56 = por %p54, %p55
      %p58 = scmp.ne.s32.totalorder %s41, %s57
      %p59 = scmp.eq.s32.totalorder %s33, 0
      %p60 = por %p58, %p59
      %s62 = sadd.s32 %s61, 1
      %p65 = scmp.eq.s32.totalorder %s27, 1
      %p66 = scmp.ne.s32.totalorder %s61, %s63
      %p67 = scmp.eq.s32.totalorder %s27, 0
      %p68 = por %p66, %p67
      %p69 = scmp.ne.s32.totalorder %s61, %s63
      %p70 = scmp.eq.s32.totalorder %s32, 1
      %p71 = por %p69, %p70
      %p72 = scmp.ne.s32.totalorder %s63, %s64
      %p73 = scmp.eq.s32.totalorder %s32, 0
      %p74 = por %p72, %p73
      %p75 = scmp.ne.s32.totalorder %s63, %s64
      %p76 = scmp.eq.s32.totalorder %s33, 1
      %p77 = por %p75, %p76
      %p79 = scmp.ne.s32.totalorder %s64, %s78
      %p80 = scmp.eq.s32.totalorder %s33, 0
      %p81 = por %p79, %p80
      %s83 = sadd.s32 %s82, 1
      %p86 = scmp.eq.s32.totalorder %s27, 1
      %p87 = scmp.ne.s32.totalorder %s82, %s84
      %p88 = scmp.eq.s32.totalorder %s27, 0
      %p89 = por %p87, %p88
      %p90 = scmp.ne.s32.totalorder %s82, %s84
      %p91 = scmp.eq.s32.totalorder %s32, 1
      %p92 = por %p90, %p91
      %p93 = scmp.ne.s32.totalorder %s84, %s85
      %p94 = scmp.eq.s32.totalorder %s32, 0
      %p95 = por %p93, %p94
      %p96 = scmp.ne.s32.totalorder %s84, %s85
      %p97 = scmp.eq.s32.totalorder %s33, 1
      %p98 = por %p96, %p97
      %p100 = scmp.ne.s32.totalorder %s85, %s99
      %p101 = scmp.eq.s32.totalorder %s33, 0
      %p102 = por %p100, %p101
      %s104 = sadd.s32 %s103, 1
      %p107 = scmp.eq.s32.totalorder %s27, 1
      %p108 = scmp.ne.s32.totalorder %s103, %s105
      %p109 = scmp.eq.s32.totalorder %s27, 0
      %p110 = por %p108, %p109
      %p111 = scmp.ne.s32.totalorder %s103, %s105
      %p112 = scmp.eq.s32.totalorder %s32, 1
      %p113 = por %p111, %p112
      %p114 = scmp.ne.s32.totalorder %s105, %s106
      %p115 = scmp.eq.s32.totalorder %s32, 0
      %p116 = por %p114, %p115
      %p117 = scmp.ne.s32.totalorder %s105, %s106
      %p118 = scmp.eq.s32.totalorder %s33, 1
      %p119 = por %p117, %p118
      %p121 = scmp.ne.s32.totalorder %s106, %s120
      %p122 = scmp.eq.s32.totalorder %s33, 0
      %p123 = por %p121, %p122
      %s125 = sadd.s32 %s124, 1
      %p128 = scmp.eq.s32.totalorder %s27, 1
      %p129 = scmp.ne.s32.totalorder %s124, %s126
      %p130 = scmp.eq.s32.totalorder %s27, 0
      %p131 = por %p129, %p130
      %p132 = scmp.ne.s32.totalorder %s124, %s126
      %p133 = scmp.eq.s32.totalorder %s32, 1
      %p134 = por %p132, %p133
      %p135 = scmp.ne.s32.totalorder %s126, %s127
      %p136 = scmp.eq.s32.totalorder %s32, 0
      %p137 = por %p135, %p136
      %p138 = scmp.ne.s32.totalorder %s126, %s127
      %p139 = scmp.eq.s32.totalorder %s33, 1
      %p140 = por %p138, %p139
      %p142 = scmp.ne.s32.totalorder %s127, %s141
      %p143 = scmp.eq.s32.totalorder %s33, 0
      %p144 = por %p142, %p143
      %s146 = sadd.s32 %s145, 1
      %p149 = scmp.eq.s32.totalorder %s27, 1
      %p150 = scmp.ne.s32.totalorder %s145, %s147
      %p151 = scmp.eq.s32.totalorder %s27, 0
      %p152 = por %p150, %p151
      %p153 = scmp.ne.s32.totalorder %s145, %s147
      %p154 = scmp.eq.s32.totalorder %s32, 1
      %p155 = por %p153, %p154
      %p156 = scmp.ne.s32.totalorder %s147, %s148
      %p157 = scmp.eq.s32.totalorder %s32, 0
      %p158 = por %p156, %p157
      %p159 = scmp.ne.s32.totalorder %s147, %s148
      %p160 = scmp.eq.s32.totalorder %s33, 1
      %p161 = por %p159, %p160
      %p163 = scmp.ne.s32.totalorder %s148, %s162
      %p164 = scmp.eq.s32.totalorder %s33, 0
      %p165 = por %p163, %p164
      %s167 = sadd.s32 %s166, 1
      %p170 = scmp.eq.s32.totalorder %s27, 1
      %p171 = scmp.ne.s32.totalorder %s166, %s168
      %p172 = scmp.eq.s32.totalorder %s27, 0
      %p173 = por %p171, %p172
      %p174 = scmp.ne.s32.totalorder %s166, %s168
      %p175 = scmp.eq.s32.totalorder %s32, 1
      %p176 = por %p174, %p175
      %p177 = scmp.ne.s32.totalorder %s168, %s169
      %p178 = scmp.eq.s32.totalorder %s32, 0
      %p179 = por %p177, %p178
      %p180 = scmp.ne.s32.totalorder %s168, %s169
      %p181 = scmp.eq.s32.totalorder %s33, 1
      %p182 = por %p180, %p181
      %p184 = scmp.ne.s32.totalorder %s169, %s183
      %p185 = scmp.eq.s32.totalorder %s33, 0
      %p186 = por %p184, %p185
      %s188 = sadd.s32 %s187, 1
      %p191 = scmp.eq.s32.totalorder %s27, 1
      %p192 = scmp.ne.s32.totalorder %s187, %s189
      %p193 = scmp.eq.s32.totalorder %s27, 0
      %p194 = por %p192, %p193
      %p195 = scmp.ne.s32.totalorder %s187, %s189
      %p196 = scmp.eq.s32.totalorder %s32, 1
      %p197 = por %p195, %p196
      %p198 = scmp.ne.s32.totalorder %s189, %s190
      %p199 = scmp.eq.s32.totalorder %s32, 0
      %p200 = por %p198, %p199
      %p201 = scmp.ne.s32.totalorder %s189, %s190
      %p202 = scmp.eq.s32.totalorder %s33, 1
      %p203 = por %p201, %p202
      %p205 = scmp.ne.s32.totalorder %s190, %s204
      %p206 = scmp.eq.s32.totalorder %s33, 0
      %p207 = por %p205, %p206
      %s209 = sadd.s32 %s208, 1
      %p212 = scmp.eq.s32.totalorder %s27, 1
      %p213 = scmp.ne.s32.totalorder %s208, %s210
      %p214 = scmp.eq.s32.totalorder %s27, 0
      %p215 = por %p213, %p214
      %p216 = scmp.ne.s32.totalorder %s208, %s210
      %p217 = scmp.eq.s32.totalorder %s32, 1
      %p218 = por %p216, %p217
      %p219 = scmp.ne.s32.totalorder %s210, %s211
      %p220 = scmp.eq.s32.totalorder %s32, 0
      %p221 = por %p219, %p220
      %p222 = scmp.ne.s32.totalorder %s210, %s211
      %p223 = scmp.eq.s32.totalorder %s33, 1
      %p224 = por %p222, %p223
      %p226 = scmp.ne.s32.totalorder %s211, %s225
      %p227 = scmp.eq.s32.totalorder %s33, 0
      %p228 = por %p226, %p227
      %s230 = sadd.s32 %s229, 1
      %p233 = scmp.eq.s32.totalorder %s27, 1
      %p234 = scmp.ne.s32.totalorder %s229, %s231
      %p235 = scmp.eq.s32.totalorder %s27, 0
      %p236 = por %p234, %p235
      %p237 = scmp.ne.s32.totalorder %s229, %s231
      %p238 = scmp.eq.s32.totalorder %s32, 1
      %p239 = por %p237, %p238
      %p240 = scmp.ne.s32.totalorder %s231, %s232
      %p241 = scmp.eq.s32.totalorder %s32, 0
      %p242 = por %p240, %p241
      %p243 = scmp.ne.s32.totalorder %s231, %s232
      %p244 = scmp.eq.s32.totalorder %s33, 1
      %p245 = por %p243, %p244
      %p247 = scmp.ne.s32.totalorder %s232, %s246
      %p248 = scmp.eq.s32.totalorder %s33, 0
      %p249 = por %p247, %p248
      %s251 = sadd.s32 %s250, 1
      %p254 = scmp.eq.s32.totalorder %s27, 1
      %p255 = scmp.ne.s32.totalorder %s250, %s252
      %p256 = scmp.eq.s32.totalorder %s27, 0
      %p257 = por %p255, %p256
      %p258 = scmp.ne.s32.totalorder %s250, %s252
      %p259 = scmp.eq.s32.totalorder %s32, 1
      %p260 = por %p258, %p259
      %p261 = scmp.ne.s32.totalorder %s252, %s253
      %p262 = scmp.eq.s32.totalorder %s32, 0
      %p263 = por %p261, %p262
      %p264 = scmp.ne.s32.totalorder %s252, %s253
      %p265 = scmp.eq.s32.totalorder %s33, 1
      %p266 = por %p264, %p265
      %p268 = scmp.ne.s32.totalorder %s253, %s267
      %p269 = scmp.eq.s32.totalorder %s33, 0
      %p270 = por %p268, %p269
      %s272 = sadd.s32 %s271, 1
      %p275 = scmp.eq.s32.totalorder %s27, 1
      %p276 = scmp.ne.s32.totalorder %s271, %s273
      %p277 = scmp.eq.s32.totalorder %s27, 0
      %p278 = por %p276, %p277
      %p279 = scmp.ne.s32.totalorder %s271, %s273
      %p280 = scmp.eq.s32.totalorder %s32, 1
      %p281 = por %p279, %p280
      %p282 = scmp.ne.s32.totalorder %s273, %s274
      %p283 = scmp.eq.s32.totalorder %s32, 0
      %p284 = por %p282, %p283
      %p285 = scmp.ne.s32.totalorder %s273, %s274
      %p286 = scmp.eq.s32.totalorder %s33, 1
      %p287 = por %p285, %p286
      %p289 = scmp.ne.s32.totalorder %s274, %s288
      %p290 = scmp.eq.s32.totalorder %s33, 0
      %p291 = por %p289, %p290
      %s293 = sadd.s32 %s292, 1
      %p296 = scmp.eq.s32.totalorder %s27, 1
      %p297 = scmp.ne.s32.totalorder %s292, %s294
      %p298 = scmp.eq.s32.totalorder %s27, 0
      %p299 = por %p297, %p298
      %p300 = scmp.ne.s32.totalorder %s292, %s294
      %p301 = scmp.eq.s32.totalorder %s32, 1
      %p302 = por %p300, %p301
      %p303 = scmp.ne.s32.totalorder %s294, %s295
      %p304 = scmp.eq.s32.totalorder %s32, 0
      %p305 = por %p303, %p304
      %p306 = scmp.ne.s32.totalorder %s294, %s295
      %p307 = scmp.eq.s32.totalorder %s33, 1
      %p308 = por %p306, %p307
      %p310 = scmp.ne.s32.totalorder %s295, %s309
      %p311 = scmp.eq.s32.totalorder %s33, 0
      %p312 = por %p310, %p311
      %s313 = ssub.s32 %s27, %s34
      %p314 = scmp.eq.s32.totalorder %s313, 0
      %s316 = sadd.s32 %s315, 1
      %s317 = scalar_select %p314, %s315, %s316
      %p320 = pneg %p314
      %p321 = scmp.eq.s32.totalorder %s27, 1
      %p322 = por %p320, %p321
      %p323 = scmp.ne.s32.totalorder %s315, %s318
      %p324 = scmp.eq.s32.totalorder %s27, 0
      %p325 = por %p323, %p324
      %p326 = scmp.ne.s32.totalorder %s315, %s318
      %p327 = scmp.eq.s32.totalorder %s32, 1
      %p328 = por %p326, %p327
      %p329 = scmp.ne.s32.totalorder %s318, %s319
      %p330 = scmp.eq.s32.totalorder %s32, 0
      %p331 = por %p329, %p330
      %p332 = scmp.ne.s32.totalorder %s318, %s319
      %p333 = scmp.eq.s32.totalorder %s33, 1
      %p334 = por %p332, %p333
      %p336 = scmp.ne.s32.totalorder %s319, %s335
      %p337 = scmp.eq.s32.totalorder %s33, 0
      %p338 = por %p336, %p337
      %p339 = scmp.le.s32.totalorder 1, %s27
      %p340 = scmp.lt.s32.totalorder %s27, 3
      %p341 = pnand %p339, %p340
      %p342 = pneg %p341
      // Predicated region
      $region9: #{net_forward.1} parent=5 // pred_check
        _
      $region10: #{net_forward.1} parent=5 // pred_check_branch
        %344 = sbr.rel (%p341) target = $region12
      $region11: #{net_forward.1} parent=5 // pred_region
        %s345 = ssub.s32 %s27, 1
        // Predicated region
        $region13: #{net_forward.1} parent=11 // pred_check
          %p346 = pneg %p74
        $region14: #{net_forward.1} parent=11 // pred_check_branch
          %348 = sbr.rel (%p346) target = $region16
        $region15: #{net_forward.1} parent=11 // pred_region
          %s350 = ssub.s32 1536, 1536
          %351 = vsyncadd [#allocation8], %s350
          %s352 = sshll.u32 [#allocation7], 4
          %s353 = int_to_ptr.vmem [resolvable:$true] %s352
          %358 = dma.hbm_to_vmem [thread:$0]  %s1, 1536, %s353, [#allocation8], 128, 128, 8
        $region16: #{net_forward.1} parent=11 // pred_fallthru
          _
        // Predicated region
        $region17: #{net_forward.1} parent=11 // pred_check
          %p359 = pneg %p95
        $region18: #{net_forward.1} parent=11 // pred_check_branch
          %361 = sbr.rel (%p359) target = $region20
        $region19: #{net_forward.1} parent=11 // pred_region
          %s363 = ssub.s32 1536, 1536
          %364 = vsyncadd [#allocation8], %s363
          %s365 = sshll.u32 [#allocation9], 4
          %s366 = int_to_ptr.vmem [resolvable:$true] %s365
          %371 = dma.hbm_to_vmem [thread:$0]  %s2, 1536, %s366, [#allocation8], 128, 128, 8
        $region20: #{net_forward.1} parent=11 // pred_fallthru
          _
        // Predicated region
        $region21: #{net_forward.1} parent=11 // pred_check
          %p372 = pneg %p116
        $region22: #{net_forward.1} parent=11 // pred_check_branch
          %374 = sbr.rel (%p372) target = $region24
        $region23: #{net_forward.1} parent=11 // pred_region
          _
        $region24: #{net_forward.1} parent=11 // pred_fallthru
          _
        // Predicated region
        $region25: #{net_forward.1} parent=11 // pred_check
          %p375 = pneg %p137
        $region26: #{net_forward.1} parent=11 // pred_check_branch
          %377 = sbr.rel (%p375) target = $region28
        $region27: #{net_forward.1} parent=11 // pred_region
          _
        $region28: #{net_forward.1} parent=11 // pred_fallthru
          _
        // Predicated region
        $region29: #{net_forward.1} parent=11 // pred_check
          %p378 = pneg %p158
        $region30: #{net_forward.1} parent=11 // pred_check_branch
          %380 = sbr.rel (%p378) target = $region32
        $region31: #{net_forward.1} parent=11 // pred_region
          %s382 = ssub.s32 4608, 4608
          %383 = vsyncadd [#allocation11], %s382
          %s384 = sshll.u32 [#allocation10], 4
          %s385 = int_to_ptr.vmem [resolvable:$true] %s384
          %390 = dma.hbm_to_vmem [thread:$0]  %s5, 4608, %s385, [#allocation11], 128, 128, 8
        $region32: #{net_forward.1} parent=11 // pred_fallthru
          _
        // Predicated region
        $region33: #{net_forward.1} parent=11 // pred_check
          %p391 = pneg %p179
        $region34: #{net_forward.1} parent=11 // pred_check_branch
          %393 = sbr.rel (%p391) target = $region36
        $region35: #{net_forward.1} parent=11 // pred_region
          _
        $region36: #{net_forward.1} parent=11 // pred_fallthru
          _
        // Predicated region
        $region37: #{net_forward.1} parent=11 // pred_check
          %p394 = pneg %p200
        $region38: #{net_forward.1} parent=11 // pred_check_branch
          %396 = sbr.rel (%p394) target = $region40
        $region39: #{net_forward.1} parent=11 // pred_region
          %s398 = ssub.s32 9216, 9216
          %399 = vsyncadd [#allocation11], %s398
          %s400 = sshll.u32 [#allocation12], 4
          %s401 = int_to_ptr.vmem [resolvable:$true] %s400
          %406 = dma.hbm_to_vmem [thread:$0]  %s7, 9216, %s401, [#allocation11], 128, 128, 8
        $region40: #{net_forward.1} parent=11 // pred_fallthru
          _
        // Predicated region
        $region41: #{net_forward.1} parent=11 // pred_check
          %p407 = pneg %p221
        $region42: #{net_forward.1} parent=11 // pred_check_branch
          %409 = sbr.rel (%p407) target = $region44
        $region43: #{net_forward.1} parent=11 // pred_region
          _
        $region44: #{net_forward.1} parent=11 // pred_fallthru
          _
        // Predicated region
        $region45: #{net_forward.1} parent=11 // pred_check
          %p410 = pneg %p242
        $region46: #{net_forward.1} parent=11 // pred_check_branch
          %412 = sbr.rel (%p410) target = $region48
        $region47: #{net_forward.1} parent=11 // pred_region
          _
        $region48: #{net_forward.1} parent=11 // pred_fallthru
          _
        // Predicated region
        $region49: #{net_forward.1} parent=11 // pred_check
          %p413 = pneg %p263
        $region50: #{net_forward.1} parent=11 // pred_check_branch
          %415 = sbr.rel (%p413) target = $region52
        $region51: #{net_forward.1} parent=11 // pred_region
          _
        $region52: #{net_forward.1} parent=11 // pred_fallthru
          _
        // Predicated region
        $region53: #{net_forward.1} parent=11 // pred_check
          %p416 = pneg %p284
        $region54: #{net_forward.1} parent=11 // pred_check_branch
          %418 = sbr.rel (%p416) target = $region56
        $region55: #{net_forward.1} parent=11 // pred_region
          _
        $region56: #{net_forward.1} parent=11 // pred_fallthru
          _
        // Predicated region
        $region57: #{net_forward.1} parent=11 // pred_check
          %p419 = pneg %p305
        $region58: #{net_forward.1} parent=11 // pred_check_branch
          %421 = sbr.rel (%p419) target = $region60
        $region59: #{net_forward.1} parent=11 // pred_region
          _
        $region60: #{net_forward.1} parent=11 // pred_fallthru
          _
      $region12: #{net_forward.1} parent=5 // pred_fallthru
        _
      %p422 = scmp.lt.s32.totalorder %s27, 2
      // Predicated region
      $region61: #{net_forward.1} parent=5 // pred_check
        %p423 = pneg %p422
      $region62: #{net_forward.1} parent=5 // pred_check_branch
        %425 = sbr.rel (%p423) target = $region64
      $region63: #{net_forward.1} parent=5 // pred_region
        // Predicated region
        $region65: #{net_forward.1} parent=63 // pred_check
          %p426 = pneg %p47
        $region66: #{net_forward.1} parent=63 // pred_check_branch
          %428 = sbr.rel (%p426) target = $region68
        $region67: #{net_forward.1} parent=63 // pred_region
          %s429 = sand.u32 %s37, 1
          %s430 = scalar_lea.sflag [#allocation5], %s429
          %s431 = sand.u32 %s37, 1
          %s432 = smul.addr %s431, 32
          %s433 = scalar_lea.vmem [#allocation4], %s432
          %s435 = ssub.s32 512, 512
          %436 = vsyncadd %s430, %s435
          %s437 = smul.addr %s27, 4
          %s438 = smul.addr %s437, 128
          %s439 = scalar_lea.hbm %s0, %s438
          %s440 = sshll.u32 %s433, 4
          %s441 = int_to_ptr.vmem [resolvable:$true] %s440
          %446 = dma.hbm_to_vmem [thread:$0]  %s439, 512, %s441, %s430, 128, 128, 8
        $region68: #{net_forward.1} parent=63 // pred_fallthru
          _
      $region64: #{net_forward.1} parent=5 // pred_fallthru
        _
      %p447 = scmp.le.s32.totalorder 1, %s27
      %p448 = scmp.lt.s32.totalorder %s27, 3
      %p449 = pnand %p447, %p448
      %p450 = pneg %p449
      // Predicated region
      $region69: #{net_forward.1} parent=5 // pred_check
        _
      $region70: #{net_forward.1} parent=5 // pred_check_branch
        %452 = sbr.rel (%p449) target = $region72
      $region71: #{net_forward.1} parent=5 // pred_region
        %s453 = ssub.s32 %s27, 1
        %s454 = sand.u32 %s40, 1
        %s455 = scalar_lea.sflag [#allocation5], %s454
        %s456 = sand.u32 %s40, 1
        %s457 = smul.addr %s456, 32
        %s458 = scalar_lea.vmem [#allocation4], %s457
        // Predicated region
        $region73: #{net_forward.1} parent=71 // pred_check
          %p459 = pneg %p53
        $region74: #{net_forward.1} parent=71 // pred_check_branch
          %461 = sbr.rel (%p459) target = $region76
        $region75: #{net_forward.1} parent=71 // pred_region
          %462 = dma.done %s455, 512
        $region76: #{net_forward.1} parent=71 // pred_fallthru
          _
        // Predicated region
        $region77: #{net_forward.1} parent=71 // pred_check
          %p463 = pneg %p74
        $region78: #{net_forward.1} parent=71 // pred_check_branch
          %465 = sbr.rel (%p463) target = $region80
        $region79: #{net_forward.1} parent=71 // pred_region
          %466 = dma.done [#allocation8], 1536
        $region80: #{net_forward.1} parent=71 // pred_fallthru
          _
        // Predicated region
        $region81: #{net_forward.1} parent=71 // pred_check
          %p467 = pneg %p95
        $region82: #{net_forward.1} parent=71 // pred_check_branch
          %469 = sbr.rel (%p467) target = $region84
        $region83: #{net_forward.1} parent=71 // pred_region
          %470 = dma.done [#allocation8], 1536
        $region84: #{net_forward.1} parent=71 // pred_fallthru
          _
        // Predicated region
        $region85: #{net_forward.1} parent=71 // pred_check
          %p471 = pneg %p158
        $region86: #{net_forward.1} parent=71 // pred_check_branch
          %473 = sbr.rel (%p471) target = $region88
        $region87: #{net_forward.1} parent=71 // pred_region
          %474 = dma.done [#allocation11], 4608
        $region88: #{net_forward.1} parent=71 // pred_fallthru
          _
        // Predicated region
        $region89: #{net_forward.1} parent=71 // pred_check
          %p475 = pneg %p200
        $region90: #{net_forward.1} parent=71 // pred_check_branch
          %477 = sbr.rel (%p475) target = $region92
        $region91: #{net_forward.1} parent=71 // pred_region
          %478 = dma.done [#allocation11], 9216
        $region92: #{net_forward.1} parent=71 // pred_fallthru
          _
        %s479 = sand.u32 %s40, 1
        %s480 = scalar_lea.sflag [#allocation5], %s479
        %s481 = sand.u32 %s40, 1
        %s482 = smul.addr %s481, 32
        %s483 = scalar_lea.vmem [#allocation4], %s482
        %p484 = pneg %p53
        %p485 = pneg %p50
        %p486 = pneg %p74
        %p487 = pneg %p71
        %p488 = pneg %p95
        %p489 = pneg %p92
        %p490 = pneg %p116
        %p491 = pneg %p113
        %p492 = pneg %p137
        %p493 = pneg %p134
        %p494 = pneg %p158
        %p495 = pneg %p155
        %p496 = pneg %p179
        %p497 = pneg %p176
        %p498 = pneg %p200
        %p499 = pneg %p197
        %p500 = pneg %p221
        %p501 = pneg %p218
        %p502 = pneg %p242
        %p503 = pneg %p239
        %p504 = pneg %p263
        %p505 = pneg %p260
        %p506 = pneg %p284
        %p507 = pneg %p281
        %p508 = pneg %p305
        %p509 = pneg %p302
        %p510 = pneg %p331
        %p511 = pneg %p328
        %s512 = sand.u32 %s318, 1
        %s513 = scalar_lea.sflag [#allocation6], %s512
        %s514 = sand.u32 %s318, 1
        %s515 = scalar_lea.vmem [#allocation13], %s514
        %v516 = vld [vmem:[%s458] sm:$0xff]
        %v517 = vld [vmem:[%s458 + $0x8] sm:$0xff]
        %v518 = vld [vmem:[%s458 + $0x10] sm:$0xff]
        %v519 = vld [vmem:[%s458 + $0x18] sm:$0x3f]
        %v520 = vld [vmem:[#allocation7] sm:$0xff]
        %v521 = vld [vmem:[#allocation7 + $0x8] sm:$0xff]
        %v522 = vld [vmem:[#allocation7 + $0x10] sm:$0xff]
        %v523 = vld [vmem:[#allocation7 + $0x18] sm:$0xff]
        %v524 = vld [vmem:[#allocation9] sm:$0xff]
        %v525 = vld [vmem:[#allocation9 + $0x8] sm:$0xff]
        %v526 = vld [vmem:[#allocation9 + $0x10] sm:$0xff]
        %v527 = vld [vmem:[#allocation9 + $0x18] sm:$0xff]
        %v528 = vld [vmem:[%s458 + $0x1] sm:$0xff]
        %v529 = vld [vmem:[%s458 + $0x9] sm:$0xff]
        %v530 = vld [vmem:[%s458 + $0x11] sm:$0xff]
        %v531 = vld [vmem:[%s458 + $0x19] sm:$0x3f]
        %s532 = scalar_lea.vmem [#allocation7], 32
        %v533 = vld [vmem:[%s532] sm:$0xff]
        %v534 = vld [vmem:[%s532 + $0x8] sm:$0xff]
        %v535 = vld [vmem:[%s532 + $0x10] sm:$0xff]
        %v536 = vld [vmem:[%s532 + $0x18] sm:$0xff]
        %vm537 = vcmask 261120
        %v539 = vsel %vm537, %v528, 0
        %v542 = vsel %vm537, %v529, 0
        %v545 = vsel %vm537, %v530, 0
        %v548 = vsel %vm537, %v531, 0
        %550 = vmatprep.subr.mxu0 0.0
        %551 = vmatpush1.msra.mxu0 %v533
        %552 = vmatprep.subr.mxu0 0.0
        %553 = vmatpush1.msra.mxu0 %v534
        %554 = vmatprep.subr.mxu0 0.0
        %555 = vmatpush1.msra.mxu0 %v535
        %556 = vmatprep.subr.mxu0 0.0
        %557 = vmatpush1.msra.mxu0 %v536
        %558 = vmatprep.subr.mxu0 0.0
        %559 = vmatpush1.msra.mxu0 0.0
        %560 = vmatprep.subr.mxu0 0.0
        %561 = vmatpush1.msra.mxu0 0.0
        %562 = vmatprep.subr.mxu0 0.0
        %563 = vmatpush1.msra.mxu0 0.0
        %564 = vmatprep.subr.mxu0 0.0
        %565 = vmatpush1.msra.mxu0 0.0
        %566 = vmatprep.subr.mxu0 0.0
        %567 = vmatpush1.msra.mxu0 0.0
        %568 = vmatprep.subr.mxu0 0.0
        %569 = vmatpush1.msra.mxu0 0.0
        %570 = vmatprep.subr.mxu0 0.0
        %571 = vmatpush1.msra.mxu0 0.0
        %572 = vmatprep.subr.mxu0 0.0
        %573 = vmatpush1.msra.mxu0 0.0
        %574 = vmatprep.subr.mxu0 0.0
        %575 = vmatpush1.msra.mxu0 0.0
        %576 = vmatprep.subr.mxu0 0.0
        %577 = vmatpush1.msra.mxu0 0.0
        %578 = vmatprep.subr.mxu0 0.0
        %579 = vmatpush1.msra.mxu0 0.0
        %580 = vmatprep.subr.mxu0 0.0
        %581 = vmatpush1.msra.mxu0 0.0
        %582 = vmatprep.subr.mxu0 0.0
        %583 = vmatpush1.msra.mxu0 0.0
        %584 = vmatprep.subr.mxu0 0.0
        %585 = vmatpush1.msra.mxu0 0.0
        %586 = vmatprep.subr.mxu0 0.0
        %587 = vmatpush1.msra.mxu0 0.0
        %588 = vmatprep.subr.mxu0 0.0
        %589 = vmatpush1.msra.mxu0 0.0
        %590 = vmatprep.subr.mxu0 0.0
        %591 = vmatpush1.msra.mxu0 0.0
        %592 = vmatprep.subr.mxu0 0.0
        %593 = vmatpush1.msra.mxu0 0.0
        %594 = vmatprep.subr.mxu0 0.0
        %595 = vmatpush1.msra.mxu0 0.0
        %596 = vmatprep.subr.mxu0 0.0
        %597 = vmatpush1.msra.mxu0 0.0
        %598 = vmatprep.subr.mxu0 0.0
        %599 = vmatpush1.msra.mxu0 0.0
        %600 = vmatprep.subr.mxu0 0.0
        %601 = vmatpush1.msra.mxu0 0.0
        %602 = vmatprep.subr.mxu0 0.0
        %603 = vmatpush1.msra.mxu0 0.0
        %604 = vmatprep.subr.mxu0 0.0
        %605 = vmatpush1.msra.mxu0 0.0
        %606 = vmatprep.subr.mxu0 0.0
        %607 = vmatpush1.msra.mxu0 0.0
        %608 = vmatprep.subr.mxu0 0.0
        %609 = vmatpush1.msra.mxu0 0.0
        %610 = vmatprep.subr.mxu0 0.0
        %611 = vmatpush1.msra.mxu0 0.0
        %612 = vmatprep.subr.mxu0 0.0
        %613 = vmatpush1.msra.mxu0 0.0
        %614 = vmatprep.mubr.f32.mxu0 0.0
        %615 = vmatmul.mubr.f32.gmra.mrb[0].mxu0 %v539
        %v616 = vpop.f32.mrb[0].mxu0
        %v617 = vadd.f32 0.0, %v616
        %v618 = vpop.f32.mrb[0].mxu0
        %619 = vmatprep.mubr.f32.mxu0 0.0
        %620 = vmatmul.mubr.f32.gmra.mrb[0].mxu0 %v542
        %v621 = vpop.f32.mrb[0].mxu0
        %v622 = vadd.f32 0.0, %v621
        %v623 = vpop.f32.mrb[0].mxu0
        %624 = vmatprep.mubr.f32.mxu0 0.0
        %625 = vmatmul.mubr.f32.gmra.mrb[0].mxu0 %v545
        %v626 = vpop.f32.mrb[0].mxu0
        %v627 = vadd.f32 0.0, %v626
        %v628 = vpop.f32.mrb[0].mxu0
        %629 = vmatprep.mubr.f32.mxu0 0.0
        %630 = vmatmul.mubr.f32.gmra.mrb[0].mxu0 %v548
        %v631 = vpop.f32.mrb[0].mxu0
        %v632 = vadd.f32 0.0, %v631
        %v633 = vpop.f32.mrb[0].mxu0
        %634 = vdwg.mxu0
        %v636 = vsel %vm537, %v516, 0
        %v639 = vsel %vm537, %v517, 0
        %v642 = vsel %vm537, %v518, 0
        %v645 = vsel %vm537, %v519, 0
        %647 = vmatprep.subr.mxu0 0.0
        %648 = vmatpush1.msra.mxu0 %v520
        %649 = vmatprep.subr.mxu0 0.0
        %650 = vmatpush1.msra.mxu0 %v521
        %651 = vmatprep.subr.mxu0 0.0
        %652 = vmatpush1.msra.mxu0 %v522
        %653 = vmatprep.subr.mxu0 0.0
        %654 = vmatpush1.msra.mxu0 %v523
        %655 = vmatprep.subr.mxu0 0.0
        %656 = vmatpush1.msra.mxu0 0.0
        %657 = vmatprep.subr.mxu0 0.0
        %658 = vmatpush1.msra.mxu0 0.0
        %659 = vmatprep.subr.mxu0 0.0
        %660 = vmatpush1.msra.mxu0 0.0
        %661 = vmatprep.subr.mxu0 0.0
        %662 = vmatpush1.msra.mxu0 0.0
        %663 = vmatprep.subr.mxu0 0.0
        %664 = vmatpush1.msra.mxu0 0.0
        %665 = vmatprep.subr.mxu0 0.0
        %666 = vmatpush1.msra.mxu0 0.0
        %667 = vmatprep.subr.mxu0 0.0
        %668 = vmatpush1.msra.mxu0 0.0
        %669 = vmatprep.subr.mxu0 0.0
        %670 = vmatpush1.msra.mxu0 0.0
        %671 = vmatprep.subr.mxu0 0.0
        %672 = vmatpush1.msra.mxu0 0.0
        %673 = vmatprep.subr.mxu0 0.0
        %674 = vmatpush1.msra.mxu0 0.0
        %675 = vmatprep.subr.mxu0 0.0
        %676 = vmatpush1.msra.mxu0 0.0
        %677 = vmatprep.subr.mxu0 0.0
        %678 = vmatpush1.msra.mxu0 0.0
        %679 = vmatprep.subr.mxu0 0.0
        %680 = vmatpush1.msra.mxu0 0.0
        %681 = vmatprep.subr.mxu0 0.0
        %682 = vmatpush1.msra.mxu0 0.0
        %683 = vmatprep.subr.mxu0 0.0
        %684 = vmatpush1.msra.mxu0 0.0
        %685 = vmatprep.subr.mxu0 0.0
        %686 = vmatpush1.msra.mxu0 0.0
        %687 = vmatprep.subr.mxu0 0.0
        %688 = vmatpush1.msra.mxu0 0.0
        %689 = vmatprep.subr.mxu0 0.0
        %690 = vmatpush1.msra.mxu0 0.0
        %691 = vmatprep.subr.mxu0 0.0
        %692 = vmatpush1.msra.mxu0 0.0
        %693 = vmatprep.subr.mxu0 0.0
        %694 = vmatpush1.msra.mxu0 0.0
        %695 = vmatprep.subr.mxu0 0.0
        %696 = vmatpush1.msra.mxu0 0.0
        %697 = vmatprep.subr.mxu0 0.0
        %698 = vmatpush1.msra.mxu0 0.0
        %699 = vmatprep.subr.mxu0 0.0
        %700 = vmatpush1.msra.mxu0 0.0
        %701 = vmatprep.subr.mxu0 0.0
        %702 = vmatpush1.msra.mxu0 0.0
        %703 = vmatprep.subr.mxu0 0.0
        %704 = vmatpush1.msra.mxu0 0.0
        %705 = vmatprep.subr.mxu0 0.0
        %706 = vmatpush1.msra.mxu0 0.0
        %707 = vmatprep.subr.mxu0 0.0
        %708 = vmatpush1.msra.mxu0 0.0
        %709 = vmatprep.subr.mxu0 0.0
        %710 = vmatpush1.msra.mxu0 0.0
        %711 = vmatprep.mubr.f32.mxu0 0.0
        %712 = vmatmul.mubr.f32.gmra.mrb[0].mxu0 %v636
        %v713 = vpop.f32.mrb[0].mxu0
        %v714 = vadd.f32 %v617, %v713
        %v715 = vpop.f32.mrb[0].mxu0
        %716 = vmatprep.mubr.f32.mxu0 0.0
        %717 = vmatmul.mubr.f32.gmra.mrb[0].mxu0 %v639
        %v718 = vpop.f32.mrb[0].mxu0
        %v719 = vadd.f32 %v622, %v718
        %v720 = vpop.f32.mrb[0].mxu0
        %721 = vmatprep.mubr.f32.mxu0 0.0
        %722 = vmatmul.mubr.f32.gmra.mrb[0].mxu0 %v642
        %v723 = vpop.f32.mrb[0].mxu0
        %v724 = vadd.f32 %v627, %v723
        %v725 = vpop.f32.mrb[0].mxu0
        %726 = vmatprep.mubr.f32.mxu0 0.0
        %727 = vmatmul.mubr.f32.gmra.mrb[0].mxu0 %v645
        %v728 = vpop.f32.mrb[0].mxu0
        %v729 = vadd.f32 %v632, %v728
        %v730 = vpop.f32.mrb[0].mxu0
        %731 = vdwg.mxu0
        %s732 = scalar_lea.vmem [#allocation9], 32
        %v733 = vld [vmem:[%s732] sm:$0xff]
        %v734 = vld [vmem:[%s732 + $0x8] sm:$0xff]
        %v735 = vld [vmem:[%s732 + $0x10] sm:$0xff]
        %v736 = vld [vmem:[%s732 + $0x18] sm:$0xff]
        %737 = vmatprep.subr.mxu0 0.0
        %738 = vmatpush1.msra.mxu0 %v733
        %739 = vmatprep.subr.mxu0 0.0
        %740 = vmatpush1.msra.mxu0 %v734
        %741 = vmatprep.subr.mxu0 0.0
        %742 = vmatpush1.msra.mxu0 %v735
        %743 = vmatprep.subr.mxu0 0.0
        %744 = vmatpush1.msra.mxu0 %v736
        %745 = vmatprep.subr.mxu0 0.0
        %746 = vmatpush1.msra.mxu0 0.0
        %747 = vmatprep.subr.mxu0 0.0
        %748 = vmatpush1.msra.mxu0 0.0
        %749 = vmatprep.subr.mxu0 0.0
        %750 = vmatpush1.msra.mxu0 0.0
        %751 = vmatprep.subr.mxu0 0.0
        %752 = vmatpush1.msra.mxu0 0.0
        %753 = vmatprep.subr.mxu0 0.0
        %754 = vmatpush1.msra.mxu0 0.0
        %755 = vmatprep.subr.mxu0 0.0
        %756 = vmatpush1.msra.mxu0 0.0
        %757 = vmatprep.subr.mxu0 0.0
        %758 = vmatpush1.msra.mxu0 0.0
        %759 = vmatprep.subr.mxu0 0.0
        %760 = vmatpush1.msra.mxu0 0.0
        %761 = vmatprep.subr.mxu0 0.0
        %762 = vmatpush1.msra.mxu0 0.0
        %763 = vmatprep.subr.mxu0 0.0
        %764 = vmatpush1.msra.mxu0 0.0
        %765 = vmatprep.subr.mxu0 0.0
        %766 = vmatpush1.msra.mxu0 0.0
        %767 = vmatprep.subr.mxu0 0.0
        %768 = vmatpush1.msra.mxu0 0.0
        %769 = vmatprep.subr.mxu0 0.0
        %770 = vmatpush1.msra.mxu0 0.0
        %771 = vmatprep.subr.mxu0 0.0
        %772 = vmatpush1.msra.mxu0 0.0
        %773 = vmatprep.subr.mxu0 0.0
        %774 = vmatpush1.msra.mxu0 0.0
        %775 = vmatprep.subr.mxu0 0.0
        %776 = vmatpush1.msra.mxu0 0.0
        %777 = vmatprep.subr.mxu0 0.0
        %778 = vmatpush1.msra.mxu0 0.0
        %779 = vmatprep.subr.mxu0 0.0
        %780 = vmatpush1.msra.mxu0 0.0
        %781 = vmatprep.subr.mxu0 0.0
        %782 = vmatpush1.msra.mxu0 0.0
        %783 = vmatprep.subr.mxu0 0.0
        %784 = vmatpush1.msra.mxu0 0.0
        %785 = vmatprep.subr.mxu0 0.0
        %786 = vmatpush1.msra.mxu0 0.0
        %787 = vmatprep.subr.mxu0 0.0
        %788 = vmatpush1.msra.mxu0 0.0
        %789 = vmatprep.subr.mxu0 0.0
        %790 = vmatpush1.msra.mxu0 0.0
        %791 = vmatprep.subr.mxu0 0.0
        %792 = vmatpush1.msra.mxu0 0.0
        %793 = vmatprep.subr.mxu0 0.0
        %794 = vmatpush1.msra.mxu0 0.0
        %795 = vmatprep.subr.mxu0 0.0
        %796 = vmatpush1.msra.mxu0 0.0
        %797 = vmatprep.subr.mxu0 0.0
        %798 = vmatpush1.msra.mxu0 0.0
        %799 = vmatprep.subr.mxu0 0.0
        %800 = vmatpush1.msra.mxu0 0.0
        %801 = vmatprep.mubr.f32.mxu0 0.0
        %802 = vmatmul.mubr.f32.gmra.mrb[0].mxu0 %v539
        %v803 = vpop.f32.mrb[0].mxu0
        %v804 = vadd.f32 0.0, %v803
        %v805 = vpop.f32.mrb[0].mxu0
        %806 = vmatprep.mubr.f32.mxu0 0.0
        %807 = vmatmul.mubr.f32.gmra.mrb[0].mxu0 %v542
        %v808 = vpop.f32.mrb[0].mxu0
        %v809 = vadd.f32 0.0, %v808
        %v810 = vpop.f32.mrb[0].mxu0
        %811 = vmatprep.mubr.f32.mxu0 0.0
        %812 = vmatmul.mubr.f32.gmra.mrb[0].mxu0 %v545
        %v813 = vpop.f32.mrb[0].mxu0
        %v814 = vadd.f32 0.0, %v813
        %v815 = vpop.f32.mrb[0].mxu0
        %816 = vmatprep.mubr.f32.mxu0 0.0
        %817 = vmatmul.mubr.f32.gmra.mrb[0].mxu0 %v548
        %v818 = vpop.f32.mrb[0].mxu0
        %v819 = vadd.f32 0.0, %v818
        %v820 = vpop.f32.mrb[0].mxu0
        %821 = vdwg.mxu0
        %822 = vmatprep.subr.mxu0 0.0
        %823 = vmatpush1.msra.mxu0 %v524
        %824 = vmatprep.subr.mxu0 0.0
        %825 = vmatpush1.msra.mxu0 %v525
        %826 = vmatprep.subr.mxu0 0.0
        %827 = vmatpush1.msra.mxu0 %v526
        %828 = vmatprep.subr.mxu0 0.0
        %829 = vmatpush1.msra.mxu0 %v527
        %830 = vmatprep.subr.mxu0 0.0
        %831 = vmatpush1.msra.mxu0 0.0
        %832 = vmatprep.subr.mxu0 0.0
        %833 = vmatpush1.msra.mxu0 0.0
        %834 = vmatprep.subr.mxu0 0.0
        %835 = vmatpush1.msra.mxu0 0.0
        %836 = vmatprep.subr.mxu0 0.0
        %837 = vmatpush1.msra.mxu0 0.0
        %838 = vmatprep.subr.mxu0 0.0
        %839 = vmatpush1.msra.mxu0 0.0
        %840 = vmatprep.subr.mxu0 0.0
        %841 = vmatpush1.msra.mxu0 0.0
        %842 = vmatprep.subr.mxu0 0.0
        %843 = vmatpush1.msra.mxu0 0.0
        %844 = vmatprep.subr.mxu0 0.0
        %845 = vmatpush1.msra.mxu0 0.0
        %846 = vmatprep.subr.mxu0 0.0
        %847 = vmatpush1.msra.mxu0 0.0
        %848 = vmatprep.subr.mxu0 0.0
        %849 = vmatpush1.msra.mxu0 0.0
        %850 = vmatprep.subr.mxu0 0.0
        %851 = vmatpush1.msra.mxu0 0.0
        %852 = vmatprep.subr.mxu0 0.0
        %853 = vmatpush1.msra.mxu0 0.0
        %854 = vmatprep.subr.mxu0 0.0
        %855 = vmatpush1.msra.mxu0 0.0
        %856 = vmatprep.subr.mxu0 0.0
        %857 = vmatpush1.msra.mxu0 0.0
        %858 = vmatprep.subr.mxu0 0.0
        %859 = vmatpush1.msra.mxu0 0.0
        %860 = vmatprep.subr.mxu0 0.0
        %861 = vmatpush1.msra.mxu0 0.0
        %862 = vmatprep.subr.mxu0 0.0
        %863 = vmatpush1.msra.mxu0 0.0
        %864 = vmatprep.subr.mxu0 0.0
        %865 = vmatpush1.msra.mxu0 0.0
        %866 = vmatprep.subr.mxu0 0.0
        %867 = vmatpush1.msra.mxu0 0.0
        %868 = vmatprep.subr.mxu0 0.0
        %869 = vmatpush1.msra.mxu0 0.0
        %870 = vmatprep.subr.mxu0 0.0
        %871 = vmatpush1.msra.mxu0 0.0
        %872 = vmatprep.subr.mxu0 0.0
        %873 = vmatpush1.msra.mxu0 0.0
        %874 = vmatprep.subr.mxu0 0.0
        %875 = vmatpush1.msra.mxu0 0.0
        %876 = vmatprep.subr.mxu0 0.0
        %877 = vmatpush1.msra.mxu0 0.0
        %878 = vmatprep.subr.mxu0 0.0
        %879 = vmatpush1.msra.mxu0 0.0
        %880 = vmatprep.subr.mxu0 0.0
        %881 = vmatpush1.msra.mxu0 0.0
        %882 = vmatprep.subr.mxu0 0.0
        %883 = vmatpush1.msra.mxu0 0.0
        %884 = vmatprep.subr.mxu0 0.0
        %885 = vmatpush1.msra.mxu0 0.0
        %886 = vmatprep.mubr.f32.mxu0 0.0
        %887 = vmatmul.mubr.f32.gmra.mrb[0].mxu0 %v636
        %v888 = vpop.f32.mrb[0].mxu0
        %v889 = vadd.f32 %v804, %v888
        %v890 = vpop.f32.mrb[0].mxu0
        %891 = vmatprep.mubr.f32.mxu0 0.0
        %892 = vmatmul.mubr.f32.gmra.mrb[0].mxu0 %v639
        %v893 = vpop.f32.mrb[0].mxu0
        %v894 = vadd.f32 %v809, %v893
        %v895 = vpop.f32.mrb[0].mxu0
        %896 = vmatprep.mubr.f32.mxu0 0.0
        %897 = vmatmul.mubr.f32.gmra.mrb[0].mxu0 %v642
        %v898 = vpop.f32.mrb[0].mxu0
        %v899 = vadd.f32 %v814, %v898
        %v900 = vpop.f32.mrb[0].mxu0
        %901 = vmatprep.mubr.f32.mxu0 0.0
        %902 = vmatmul.mubr.f32.gmra.mrb[0].mxu0 %v645
        %v903 = vpop.f32.mrb[0].mxu0
        %v904 = vadd.f32 %v819, %v903
        %v905 = vpop.f32.mrb[0].mxu0
        %906 = vdwg.mxu0
        %v907 = vld [vmem:[%s458 + $0x2] sm:$0xff]
        %v908 = vld [vmem:[%s458 + $0xa] sm:$0xff]
        %v909 = vld [vmem:[%s458 + $0x12] sm:$0xff]
        %v910 = vld [vmem:[%s458 + $0x1a] sm:$0x3f]
        %s911 = scalar_lea.vmem [#allocation7], 64
        %v912 = vld [vmem:[%s911] sm:$0xff]
        %v913 = vld [vmem:[%s911 + $0x8] sm:$0xff]
        %v914 = vld [vmem:[%s911 + $0x10] sm:$0xff]
        %v915 = vld [vmem:[%s911 + $0x18] sm:$0xff]
        %v917 = vsel %vm537, %v907, 0
        %v920 = vsel %vm537, %v908, 0
        %v923 = vsel %vm537, %v909, 0
        %v926 = vsel %vm537, %v910, 0
        %928 = vmatprep.subr.mxu0 0.0
        %929 = vmatpush1.msra.mxu0 %v912
        %930 = vmatprep.subr.mxu0 0.0
        %931 = vmatpush1.msra.mxu0 %v913
        %932 = vmatprep.subr.mxu0 0.0
        %933 = vmatpush1.msra.mxu0 %v914
        %934 = vmatprep.subr.mxu0 0.0
        %935 = vmatpush1.msra.mxu0 %v915
        %936 = vmatprep.subr.mxu0 0.0
        %937 = vmatpush1.msra.mxu0 0.0
        %938 = vmatprep.subr.mxu0 0.0
        %939 = vmatpush1.msra.mxu0 0.0
        %940 = vmatprep.subr.mxu0 0.0
        %941 = vmatpush1.msra.mxu0 0.0
        %942 = vmatprep.subr.mxu0 0.0
        %943 = vmatpush1.msra.mxu0 0.0
        %944 = vmatprep.subr.mxu0 0.0
        %945 = vmatpush1.msra.mxu0 0.0
        %946 = vmatprep.subr.mxu0 0.0
        %947 = vmatpush1.msra.mxu0 0.0
        %948 = vmatprep.subr.mxu0 0.0
        %949 = vmatpush1.msra.mxu0 0.0
        %950 = vmatprep.subr.mxu0 0.0
        %951 = vmatpush1.msra.mxu0 0.0
        %952 = vmatprep.subr.mxu0 0.0
        %953 = vmatpush1.msra.mxu0 0.0
        %954 = vmatprep.subr.mxu0 0.0
        %955 = vmatpush1.msra.mxu0 0.0
        %956 = vmatprep.subr.mxu0 0.0
        %957 = vmatpush1.msra.mxu0 0.0
        %958 = vmatprep.subr.mxu0 0.0
        %959 = vmatpush1.msra.mxu0 0.0
        %960 = vmatprep.subr.mxu0 0.0
        %961 = vmatpush1.msra.mxu0 0.0
        %962 = vmatprep.subr.mxu0 0.0
        %963 = vmatpush1.msra.mxu0 0.0
        %964 = vmatprep.subr.mxu0 0.0
        %965 = vmatpush1.msra.mxu0 0.0
        %966 = vmatprep.subr.mxu0 0.0
        %967 = vmatpush1.msra.mxu0 0.0
        %968 = vmatprep.subr.mxu0 0.0
        %969 = vmatpush1.msra.mxu0 0.0
        %970 = vmatprep.subr.mxu0 0.0
        %971 = vmatpush1.msra.mxu0 0.0
        %972 = vmatprep.subr.mxu0 0.0
        %973 = vmatpush1.msra.mxu0 0.0
        %974 = vmatprep.subr.mxu0 0.0
        %975 = vmatpush1.msra.mxu0 0.0
        %976 = vmatprep.subr.mxu0 0.0
        %977 = vmatpush1.msra.mxu0 0.0
        %978 = vmatprep.subr.mxu0 0.0
        %979 = vmatpush1.msra.mxu0 0.0
        %980 = vmatprep.subr.mxu0 0.0
        %981 = vmatpush1.msra.mxu0 0.0
        %982 = vmatprep.subr.mxu0 0.0
        %983 = vmatpush1.msra.mxu0 0.0
        %984 = vmatprep.subr.mxu0 0.0
        %985 = vmatpush1.msra.mxu0 0.0
        %986 = vmatprep.subr.mxu0 0.0
        %987 = vmatpush1.msra.mxu0 0.0
        %988 = vmatprep.subr.mxu0 0.0
        %989 = vmatpush1.msra.mxu0 0.0
        %990 = vmatprep.subr.mxu0 0.0
        %991 = vmatpush1.msra.mxu0 0.0
        %992 = vmatprep.mubr.f32.mxu0 0.0
        %993 = vmatmul.mubr.f32.gmra.mrb[0].mxu0 %v917
        %v994 = vpop.f32.mrb[0].mxu0
        %v995 = vadd.f32 0.0, %v994
        %v996 = vpop.f32.mrb[0].mxu0
        %997 = vmatprep.mubr.f32.mxu0 0.0
        %998 = vmatmul.mubr.f32.gmra.mrb[0].mxu0 %v920
        %v999 = vpop.f32.mrb[0].mxu0
        %v1000 = vadd.f32 0.0, %v999
        %v1001 = vpop.f32.mrb[0].mxu0
        %1002 = vmatprep.mubr.f32.mxu0 0.0
        %1003 = vmatmul.mubr.f32.gmra.mrb[0].mxu0 %v923
        %v1004 = vpop.f32.mrb[0].mxu0
        %v1005 = vadd.f32 0.0, %v1004
        %v1006 = vpop.f32.mrb[0].mxu0
        %1007 = vmatprep.mubr.f32.mxu0 0.0
        %1008 = vmatmul.mubr.f32.gmra.mrb[0].mxu0 %v926
        %v1009 = vpop.f32.mrb[0].mxu0
        %v1010 = vadd.f32 0.0, %v1009
        %v1011 = vpop.f32.mrb[0].mxu0
        %1012 = vdwg.mxu0
        %v1013 = vadd.f32 %v714, %v995
        %v1014 = vadd.f32 %v719, %v1000
        %v1015 = vadd.f32 %v724, %v1005
        %v1016 = vadd.f32 %v729, %v1010
        %s1017 = scalar_lea.vmem [#allocation9], 64
        %v1018 = vld [vmem:[%s1017] sm:$0xff]
        %v1019 = vld [vmem:[%s1017 + $0x8] sm:$0xff]
        %v1020 = vld [vmem:[%s1017 + $0x10] sm:$0xff]
        %v1021 = vld [vmem:[%s1017 + $0x18] sm:$0xff]
        %1022 = vmatprep.subr.mxu0 0.0
        %1023 = vmatpush1.msra.mxu0 %v1018
        %1024 = vmatprep.subr.mxu0 0.0
        %1025 = vmatpush1.msra.mxu0 %v1019
        %1026 = vmatprep.subr.mxu0 0.0
        %1027 = vmatpush1.msra.mxu0 %v1020
        %1028 = vmatprep.subr.mxu0 0.0
        %1029 = vmatpush1.msra.mxu0 %v1021
        %1030 = vmatprep.subr.mxu0 0.0
        %1031 = vmatpush1.msra.mxu0 0.0
        %1032 = vmatprep.subr.mxu0 0.0
        %1033 = vmatpush1.msra.mxu0 0.0
        %1034 = vmatprep.subr.mxu0 0.0
        %1035 = vmatpush1.msra.mxu0 0.0
        %1036 = vmatprep.subr.mxu0 0.0
        %1037 = vmatpush1.msra.mxu0 0.0
        %1038 = vmatprep.subr.mxu0 0.0
        %1039 = vmatpush1.msra.mxu0 0.0
        %1040 = vmatprep.subr.mxu0 0.0
        %1041 = vmatpush1.msra.mxu0 0.0
        %1042 = vmatprep.subr.mxu0 0.0
        %1043 = vmatpush1.msra.mxu0 0.0
        %1044 = vmatprep.subr.mxu0 0.0
        %1045 = vmatpush1.msra.mxu0 0.0
        %1046 = vmatprep.subr.mxu0 0.0
        %1047 = vmatpush1.msra.mxu0 0.0
        %1048 = vmatprep.subr.mxu0 0.0
        %1049 = vmatpush1.msra.mxu0 0.0
        %1050 = vmatprep.subr.mxu0 0.0
        %1051 = vmatpush1.msra.mxu0 0.0
        %1052 = vmatprep.subr.mxu0 0.0
        %1053 = vmatpush1.msra.mxu0 0.0
        %1054 = vmatprep.subr.mxu0 0.0
        %1055 = vmatpush1.msra.mxu0 0.0
        %1056 = vmatprep.subr.mxu0 0.0
        %1057 = vmatpush1.msra.mxu0 0.0
        %1058 = vmatprep.subr.mxu0 0.0
        %1059 = vmatpush1.msra.mxu0 0.0
        %1060 = vmatprep.subr.mxu0 0.0
        %1061 = vmatpush1.msra.mxu0 0.0
        %1062 = vmatprep.subr.mxu0 0.0
        %1063 = vmatpush1.msra.mxu0 0.0
        %1064 = vmatprep.subr.mxu0 0.0
        %1065 = vmatpush1.msra.mxu0 0.0
        %1066 = vmatprep.subr.mxu0 0.0
        %1067 = vmatpush1.msra.mxu0 0.0
        %1068 = vmatprep.subr.mxu0 0.0
        %1069 = vmatpush1.msra.mxu0 0.0
        %1070 = vmatprep.subr.mxu0 0.0
        %1071 = vmatpush1.msra.mxu0 0.0
        %1072 = vmatprep.subr.mxu0 0.0
        %1073 = vmatpush1.msra.mxu0 0.0
        %1074 = vmatprep.subr.mxu0 0.0
        %1075 = vmatpush1.msra.mxu0 0.0
        %1076 = vmatprep.subr.mxu0 0.0
        %1077 = vmatpush1.msra.mxu0 0.0
        %1078 = vmatprep.subr.mxu0 0.0
        %1079 = vmatpush1.msra.mxu0 0.0
        %1080 = vmatprep.subr.mxu0 0.0
        %1081 = vmatpush1.msra.mxu0 0.0
        %1082 = vmatprep.subr.mxu0 0.0
        %1083 = vmatpush1.msra.mxu0 0.0
        %1084 = vmatprep.subr.mxu0 0.0
        %1085 = vmatpush1.msra.mxu0 0.0
        %1086 = vmatprep.mubr.f32.mxu0 0.0
        %1087 = vmatmul.mubr.f32.gmra.mrb[0].mxu0 %v917
        %v1088 = vpop.f32.mrb[0].mxu0
        %v1089 = vadd.f32 0.0, %v1088
        %v1090 = vpop.f32.mrb[0].mxu0
        %1091 = vmatprep.mubr.f32.mxu0 0.0
        %1092 = vmatmul.mubr.f32.gmra.mrb[0].mxu0 %v920
        %v1093 = vpop.f32.mrb[0].mxu0
        %v1094 = vadd.f32 0.0, %v1093
        %v1095 = vpop.f32.mrb[0].mxu0
        %1096 = vmatprep.mubr.f32.mxu0 0.0
        %1097 = vmatmul.mubr.f32.gmra.mrb[0].mxu0 %v923
        %v1098 = vpop.f32.mrb[0].mxu0
        %v1099 = vadd.f32 0.0, %v1098
        %v1100 = vpop.f32.mrb[0].mxu0
        %1101 = vmatprep.mubr.f32.mxu0 0.0
        %1102 = vmatmul.mubr.f32.gmra.mrb[0].mxu0 %v926
        %v1103 = vpop.f32.mrb[0].mxu0
        %v1104 = vadd.f32 0.0, %v1103
        %v1105 = vpop.f32.mrb[0].mxu0
        %1106 = vdwg.mxu0
        %v1107 = vadd.f32 %v889, %v1089
        %v1108 = vadd.f32 %v894, %v1094
        %v1109 = vadd.f32 %v899, %v1099
        %v1110 = vadd.f32 %v904, %v1104
        %v1111 = vmax.f32 %v1013, %v1107
        %v1112 = vmax.f32 %v1014, %v1108
        %v1113 = vmax.f32 %v1015, %v1109
        %v1114 = vmax.f32 %v1016, %v1110
        %v1115 = vld [vmem:[%s3] sm:$0x1]
        %v1117 = vlaneseq
        %v1118 = vshrl.u32 %v1117, 7
        %v1119 = vsub.s32 0, %v1118
        %v1120 = vrot.slane %v1115, %v1119
        %v1122 = vadd.f32 %v1111, %v1120
        %v1123 = vadd.f32 %v1112, %v1120
        %v1124 = vadd.f32 %v1113, %v1120
        %v1125 = vadd.f32 %v1114, %v1120
        %v1126 = vmax.f32 %v1122, 0.0
        %v1127 = vmax.f32 %v1123, 0.0
        %v1128 = vmax.f32 %v1124, 0.0
        %v1129 = vmax.f32 %v1125, 0.0
        %vm1130 = vcmask 736256
        %1131 = vst.msk [vmem:[#allocation2] sm:$0xff] %vm1130, %v1126
        %1132 = vst.msk [vmem:[#allocation2 + $0x8] sm:$0xff] %vm1130, %v1127
        %1133 = vst.msk [vmem:[#allocation2 + $0x10] sm:$0xff] %vm1130, %v1128
        %vm1134 = vcmask 734208
        %1135 = vst.msk [vmem:[#allocation2 + $0x18] sm:$0x3f] %vm1134, %v1129
        %v1136 = vld [vmem:[#allocation2] ss:$2 sm:$0xff]
        %s1137 = scalar_lea.vmem [#allocation2], 16
        %v1138 = vld [vmem:[%s1137] ss:$2 sm:$0x1f]
        %s1139 = scalar_lea.vmem [#allocation2], 1
        %v1140 = vld [vmem:[%s1139] ss:$2 sm:$0xff]
        %s1141 = scalar_lea.vmem [#allocation2], 17
        %v1142 = vld [vmem:[%s1141] ss:$2 sm:$0x1f]
        %v1143 = vmax.f32 %v1136, %v1140
        %v1144 = vmax.f32 %v1138, %v1142
        %v1145 = vld [vmem:[%s4] sm:$0xff]
        %v1146 = vld [vmem:[%s4 + $0x8] sm:$0xff]
        %v1147 = vld [vmem:[%s4 + $0x10] sm:$0xff]
        %v1148 = vld [vmem:[%s4 + $0x18] sm:$0xff]
        %v1149 = vld [vmem:[%s4 + $0x20] sm:$0xff]
        %v1150 = vld [vmem:[%s4 + $0x28] sm:$0xff]
        %v1151 = vld [vmem:[%s4 + $0x30] sm:$0xff]
        %v1152 = vld [vmem:[%s4 + $0x38] sm:$0xff]
        %v1153 = vld [vmem:[%s4 + $0x40] sm:$0xff]
        %v1154 = vld [vmem:[%s4 + $0x48] sm:$0xff]
        %v1155 = vld [vmem:[%s4 + $0x50] sm:$0xff]
        %v1156 = vld [vmem:[%s4 + $0x58] sm:$0x3]
        %v1157 = vld [vmem:[#allocation10] sm:$0xff]
        %v1158 = vld [vmem:[#allocation10 + $0x8] sm:$0xff]
        %v1159 = vld [vmem:[#allocation10 + $0x10] sm:$0xff]
        %v1160 = vld [vmem:[#allocation10 + $0x18] sm:$0xff]
        %v1161 = vld [vmem:[#allocation10 + $0x20] sm:$0xff]
        %v1162 = vld [vmem:[#allocation10 + $0x28] sm:$0xff]
        %v1163 = vld [vmem:[#allocation10 + $0x30] sm:$0xff]
        %v1164 = vld [vmem:[#allocation10 + $0x38] sm:$0xff]
        %v1165 = vld [vmem:[#allocation10 + $0x40] sm:$0xff]
        %v1166 = vld [vmem:[#allocation10 + $0x48] sm:$0xff]
        %v1167 = vld [vmem:[#allocation10 + $0x50] sm:$0xff]
        %v1168 = vld [vmem:[#allocation10 + $0x58] sm:$0x3]
        %s1169 = scalar_lea.vmem [#allocation2], 2
        %v1170 = vld [vmem:[%s1169] ss:$2 sm:$0xff]
        %s1171 = scalar_lea.vmem [#allocation2], 18
        %v1172 = vld [vmem:[%s1171] ss:$2 sm:$0x1f]
        %s1173 = scalar_lea.vmem [#allocation2], 3
        %v1174 = vld [vmem:[%s1173] ss:$2 sm:$0xff]
        %s1175 = scalar_lea.vmem [#allocation2], 19
        %v1176 = vld [vmem:[%s1175] ss:$2 sm:$0x1f]
        %v1177 = vmax.f32 %v1170, %v1174
        %v1178 = vmax.f32 %v1172, %v1176
        %s1179 = scalar_lea.vmem %s4, 96
        %v1180 = vld [vmem:[%s1179] sm:$0xff]
        %v1181 = vld [vmem:[%s1179 + $0x8] sm:$0xff]
        %v1182 = vld [vmem:[%s1179 + $0x10] sm:$0xff]
        %v1183 = vld [vmem:[%s1179 + $0x18] sm:$0xff]
        %v1184 = vld [vmem:[%s1179 + $0x20] sm:$0xff]
        %v1185 = vld [vmem:[%s1179 + $0x28] sm:$0xff]
        %v1186 = vld [vmem:[%s1179 + $0x30] sm:$0xff]
        %v1187 = vld [vmem:[%s1179 + $0x38] sm:$0xff]
        %v1188 = vld [vmem:[%s1179 + $0x40] sm:$0xff]
        %v1189 = vld [vmem:[%s1179 + $0x48] sm:$0xff]
        %v1190 = vld [vmem:[%s1179 + $0x50] sm:$0xff]
        %v1191 = vld [vmem:[%s1179 + $0x58] sm:$0x3]
        %v1193 = vsel %vm1130, %v1177, 0
        %v1196 = vsel %vm1130, %v1178, 0
        %vm1198 = vcmask 1041408
        %v1200 = vsel %vm1198, %v1191, 0
        %1202 = vmatprep.subr.mxu0 0.0
        %1203 = vmatpush1.msra.mxu0 %v1180
        %1204 = vmatprep.subr.mxu0 0.0
        %1205 = vmatpush1.msra.mxu0 %v1181
        %1206 = vmatprep.subr.mxu0 0.0
        %1207 = vmatpush1.msra.mxu0 %v1182
        %1208 = vmatprep.subr.mxu0 0.0
        %1209 = vmatpush1.msra.mxu0 %v1183
        %1210 = vmatprep.subr.mxu0 0.0
        %1211 = vmatpush1.msra.mxu0 %v1184
        %1212 = vmatprep.subr.mxu0 0.0
        %1213 = vmatpush1.msra.mxu0 %v1185
        %1214 = vmatprep.subr.mxu0 0.0
        %1215 = vmatpush1.msra.mxu0 %v1186
        %1216 = vmatprep.subr.mxu0 0.0
        %1217 = vmatpush1.msra.mxu0 %v1187
        %1218 = vmatprep.subr.mxu0 0.0
        %1219 = vmatpush1.msra.mxu0 %v1188
        %1220 = vmatprep.subr.mxu0 0.0
        %1221 = vmatpush1.msra.mxu0 %v1189
        %1222 = vmatprep.subr.mxu0 0.0
        %1223 = vmatpush1.msra.mxu0 %v1190
        %1224 = vmatprep.subr.mxu0 0.0
        %1225 = vmatpush1.msra.mxu0 %v1200
        %1226 = vmatprep.subr.mxu0 0.0
        %1227 = vmatpush1.msra.mxu0 0.0
        %1228 = vmatprep.subr.mxu0 0.0
        %1229 = vmatpush1.msra.mxu0 0.0
        %1230 = vmatprep.subr.mxu0 0.0
        %1231 = vmatpush1.msra.mxu0 0.0
        %1232 = vmatprep.subr.mxu0 0.0
        %1233 = vmatpush1.msra.mxu0 0.0
        %1234 = vmatprep.subr.mxu0 0.0
        %1235 = vmatpush1.msra.mxu0 0.0
        %1236 = vmatprep.subr.mxu0 0.0
        %1237 = vmatpush1.msra.mxu0 0.0
        %1238 = vmatprep.subr.mxu0 0.0
        %1239 = vmatpush1.msra.mxu0 0.0
        %1240 = vmatprep.subr.mxu0 0.0
        %1241 = vmatpush1.msra.mxu0 0.0
        %1242 = vmatprep.subr.mxu0 0.0
        %1243 = vmatpush1.msra.mxu0 0.0
        %1244 = vmatprep.subr.mxu0 0.0
        %1245 = vmatpush1.msra.mxu0 0.0
        %1246 = vmatprep.subr.mxu0 0.0
        %1247 = vmatpush1.msra.mxu0 0.0
        %1248 = vmatprep.subr.mxu0 0.0
        %1249 = vmatpush1.msra.mxu0 0.0
        %1250 = vmatprep.subr.mxu0 0.0
        %1251 = vmatpush1.msra.mxu0 0.0
        %1252 = vmatprep.subr.mxu0 0.0
        %1253 = vmatpush1.msra.mxu0 0.0
        %1254 = vmatprep.subr.mxu0 0.0
        %1255 = vmatpush1.msra.mxu0 0.0
        %1256 = vmatprep.subr.mxu0 0.0
        %1257 = vmatpush1.msra.mxu0 0.0
        %1258 = vmatprep.subr.mxu0 0.0
        %1259 = vmatpush1.msra.mxu0 0.0
        %1260 = vmatprep.subr.mxu0 0.0
        %1261 = vmatpush1.msra.mxu0 0.0
        %1262 = vmatprep.subr.mxu0 0.0
        %1263 = vmatpush1.msra.mxu0 0.0
        %1264 = vmatprep.subr.mxu0 0.0
        %1265 = vmatpush1.msra.mxu0 0.0
        %1266 = vmatprep.mubr.f32.mxu0 0.0
        %1267 = vmatmul.mubr.f32.gmra.mrb[0].mxu0 %v1193
        %v1268 = vpop.f32.mrb[0].mxu0
        %v1269 = vadd.f32 0.0, %v1268
        %v1270 = vpop.f32.mrb[0].mxu0
        %1271 = vmatprep.mubr.f32.mxu0 0.0
        %1272 = vmatmul.mubr.f32.gmra.mrb[0].mxu0 %v1196
        %v1273 = vpop.f32.mrb[0].mxu0
        %v1274 = vadd.f32 0.0, %v1273
        %v1275 = vpop.f32.mrb[0].mxu0
        %1276 = vdwg.mxu0
        %v1278 = vsel %vm1130, %v1143, 0
        %v1281 = vsel %vm1130, %v1144, 0
        %v1284 = vsel %vm1198, %v1156, 0
        %1286 = vmatprep.subr.mxu0 0.0
        %1287 = vmatpush1.msra.mxu0 %v1145
        %1288 = vmatprep.subr.mxu0 0.0
        %1289 = vmatpush1.msra.mxu0 %v1146
        %1290 = vmatprep.subr.mxu0 0.0
        %1291 = vmatpush1.msra.mxu0 %v1147
        %1292 = vmatprep.subr.mxu0 0.0
        %1293 = vmatpush1.msra.mxu0 %v1148
        %1294 = vmatprep.subr.mxu0 0.0
        %1295 = vmatpush1.msra.mxu0 %v1149
        %1296 = vmatprep.subr.mxu0 0.0
        %1297 = vmatpush1.msra.mxu0 %v1150
        %1298 = vmatprep.subr.mxu0 0.0
        %1299 = vmatpush1.msra.mxu0 %v1151
        %1300 = vmatprep.subr.mxu0 0.0
        %1301 = vmatpush1.msra.mxu0 %v1152
        %1302 = vmatprep.subr.mxu0 0.0
        %1303 = vmatpush1.msra.mxu0 %v1153
        %1304 = vmatprep.subr.mxu0 0.0
        %1305 = vmatpush1.msra.mxu0 %v1154
        %1306 = vmatprep.subr.mxu0 0.0
        %1307 = vmatpush1.msra.mxu0 %v1155
        %1308 = vmatprep.subr.mxu0 0.0
        %1309 = vmatpush1.msra.mxu0 %v1284
        %1310 = vmatprep.subr.mxu0 0.0
        %1311 = vmatpush1.msra.mxu0 0.0
        %1312 = vmatprep.subr.mxu0 0.0
        %1313 = vmatpush1.msra.mxu0 0.0
        %1314 = vmatprep.subr.mxu0 0.0
        %1315 = vmatpush1.msra.mxu0 0.0
        %1316 = vmatprep.subr.mxu0 0.0
        %1317 = vmatpush1.msra.mxu0 0.0
        %1318 = vmatprep.subr.mxu0 0.0
        %1319 = vmatpush1.msra.mxu0 0.0
        %1320 = vmatprep.subr.mxu0 0.0
        %1321 = vmatpush1.msra.mxu0 0.0
        %1322 = vmatprep.subr.mxu0 0.0
        %1323 = vmatpush1.msra.mxu0 0.0
        %1324 = vmatprep.subr.mxu0 0.0
        %1325 = vmatpush1.msra.mxu0 0.0
        %1326 = vmatprep.subr.mxu0 0.0
        %1327 = vmatpush1.msra.mxu0 0.0
        %1328 = vmatprep.subr.mxu0 0.0
        %1329 = vmatpush1.msra.mxu0 0.0
        %1330 = vmatprep.subr.mxu0 0.0
        %1331 = vmatpush1.msra.mxu0 0.0
        %1332 = vmatprep.subr.mxu0 0.0
        %1333 = vmatpush1.msra.mxu0 0.0
        %1334 = vmatprep.subr.mxu0 0.0
        %1335 = vmatpush1.msra.mxu0 0.0
        %1336 = vmatprep.subr.mxu0 0.0
        %1337 = vmatpush1.msra.mxu0 0.0
        %1338 = vmatprep.subr.mxu0 0.0
        %1339 = vmatpush1.msra.mxu0 0.0
        %1340 = vmatprep.subr.mxu0 0.0
        %1341 = vmatpush1.msra.mxu0 0.0
        %1342 = vmatprep.subr.mxu0 0.0
        %1343 = vmatpush1.msra.mxu0 0.0
        %1344 = vmatprep.subr.mxu0 0.0
        %1345 = vmatpush1.msra.mxu0 0.0
        %1346 = vmatprep.subr.mxu0 0.0
        %1347 = vmatpush1.msra.mxu0 0.0
        %1348 = vmatprep.subr.mxu0 0.0
        %1349 = vmatpush1.msra.mxu0 0.0
        %1350 = vmatprep.mubr.f32.mxu0 0.0
        %1351 = vmatmul.mubr.f32.gmra.mrb[0].mxu0 %v1278
        %v1352 = vpop.f32.mrb[0].mxu0
        %v1353 = vadd.f32 %v1269, %v1352
        %v1354 = vpop.f32.mrb[0].mxu0
        %1355 = vmatprep.mubr.f32.mxu0 0.0
        %1356 = vmatmul.mubr.f32.gmra.mrb[0].mxu0 %v1281
        %v1357 = vpop.f32.mrb[0].mxu0
        %v1358 = vadd.f32 %v1274, %v1357
        %v1359 = vpop.f32.mrb[0].mxu0
        %1360 = vdwg.mxu0
        %s1361 = scalar_lea.vmem [#allocation10], 96
        %v1362 = vld [vmem:[%s1361] sm:$0xff]
        %v1363 = vld [vmem:[%s1361 + $0x8] sm:$0xff]
        %v1364 = vld [vmem:[%s1361 + $0x10] sm:$0xff]
        %v1365 = vld [vmem:[%s1361 + $0x18] sm:$0xff]
        %v1366 = vld [vmem:[%s1361 + $0x20] sm:$0xff]
        %v1367 = vld [vmem:[%s1361 + $0x28] sm:$0xff]
        %v1368 = vld [vmem:[%s1361 + $0x30] sm:$0xff]
        %v1369 = vld [vmem:[%s1361 + $0x38] sm:$0xff]
        %v1370 = vld [vmem:[%s1361 + $0x40] sm:$0xff]
        %v1371 = vld [vmem:[%s1361 + $0x48] sm:$0xff]
        %v1372 = vld [vmem:[%s1361 + $0x50] sm:$0xff]
        %v1373 = vld [vmem:[%s1361 + $0x58] sm:$0x3]
        %v1375 = vsel %vm1198, %v1373, 0
        %1377 = vmatprep.subr.mxu0 0.0
        %1378 = vmatpush1.msra.mxu0 %v1362
        %1379 = vmatprep.subr.mxu0 0.0
        %1380 = vmatpush1.msra.mxu0 %v1363
        %1381 = vmatprep.subr.mxu0 0.0
        %1382 = vmatpush1.msra.mxu0 %v1364
        %1383 = vmatprep.subr.mxu0 0.0
        %1384 = vmatpush1.msra.mxu0 %v1365
        %1385 = vmatprep.subr.mxu0 0.0
        %1386 = vmatpush1.msra.mxu0 %v1366
        %1387 = vmatprep.subr.mxu0 0.0
        %1388 = vmatpush1.msra.mxu0 %v1367
        %1389 = vmatprep.subr.mxu0 0.0
        %1390 = vmatpush1.msra.mxu0 %v1368
        %1391 = vmatprep.subr.mxu0 0.0
        %1392 = vmatpush1.msra.mxu0 %v1369
        %1393 = vmatprep.subr.mxu0 0.0
        %1394 = vmatpush1.msra.mxu0 %v1370
        %1395 = vmatprep.subr.mxu0 0.0
        %1396 = vmatpush1.msra.mxu0 %v1371
        %1397 = vmatprep.subr.mxu0 0.0
        %1398 = vmatpush1.msra.mxu0 %v1372
        %1399 = vmatprep.subr.mxu0 0.0
        %1400 = vmatpush1.msra.mxu0 %v1375
        %1401 = vmatprep.subr.mxu0 0.0
        %1402 = vmatpush1.msra.mxu0 0.0
        %1403 = vmatprep.subr.mxu0 0.0
        %1404 = vmatpush1.msra.mxu0 0.0
        %1405 = vmatprep.subr.mxu0 0.0
        %1406 = vmatpush1.msra.mxu0 0.0
        %1407 = vmatprep.subr.mxu0 0.0
        %1408 = vmatpush1.msra.mxu0 0.0
        %1409 = vmatprep.subr.mxu0 0.0
        %1410 = vmatpush1.msra.mxu0 0.0
        %1411 = vmatprep.subr.mxu0 0.0
        %1412 = vmatpush1.msra.mxu0 0.0
        %1413 = vmatprep.subr.mxu0 0.0
        %1414 = vmatpush1.msra.mxu0 0.0
        %1415 = vmatprep.subr.mxu0 0.0
        %1416 = vmatpush1.msra.mxu0 0.0
        %1417 = vmatprep.subr.mxu0 0.0
        %1418 = vmatpush1.msra.mxu0 0.0
        %1419 = vmatprep.subr.mxu0 0.0
        %1420 = vmatpush1.msra.mxu0 0.0
        %1421 = vmatprep.subr.mxu0 0.0
        %1422 = vmatpush1.msra.mxu0 0.0
        %1423 = vmatprep.subr.mxu0 0.0
        %1424 = vmatpush1.msra.mxu0 0.0
        %1425 = vmatprep.subr.mxu0 0.0
        %1426 = vmatpush1.msra.mxu0 0.0
        %1427 = vmatprep.subr.mxu0 0.0
        %1428 = vmatpush1.msra.mxu0 0.0
        %1429 = vmatprep.subr.mxu0 0.0
        %1430 = vmatpush1.msra.mxu0 0.0
        %1431 = vmatprep.subr.mxu0 0.0
        %1432 = vmatpush1.msra.mxu0 0.0
        %1433 = vmatprep.subr.mxu0 0.0
        %1434 = vmatpush1.msra.mxu0 0.0
        %1435 = vmatprep.subr.mxu0 0.0
        %1436 = vmatpush1.msra.mxu0 0.0
        %1437 = vmatprep.subr.mxu0 0.0
        %1438 = vmatpush1.msra.mxu0 0.0
        %1439 = vmatprep.subr.mxu0 0.0
        %1440 = vmatpush1.msra.mxu0 0.0
        %1441 = vmatprep.mubr.f32.mxu0 0.0
        %1442 = vmatmul.mubr.f32.gmra.mrb[0].mxu0 %v1193
        %v1443 = vpop.f32.mrb[0].mxu0
        %v1444 = vadd.f32 0.0, %v1443
        %v1445 = vpop.f32.mrb[0].mxu0
        %1446 = vmatprep.mubr.f32.mxu0 0.0
        %1447 = vmatmul.mubr.f32.gmra.mrb[0].mxu0 %v1196
        %v1448 = vpop.f32.mrb[0].mxu0
        %v1449 = vadd.f32 0.0, %v1448
        %v1450 = vpop.f32.mrb[0].mxu0
        %1451 = vdwg.mxu0
        %v1453 = vsel %vm1198, %v1168, 0
        %1455 = vmatprep.subr.mxu0 0.0
        %1456 = vmatpush1.msra.mxu0 %v1157
        %1457 = vmatprep.subr.mxu0 0.0
        %1458 = vmatpush1.msra.mxu0 %v1158
        %1459 = vmatprep.subr.mxu0 0.0
        %1460 = vmatpush1.msra.mxu0 %v1159
        %1461 = vmatprep.subr.mxu0 0.0
        %1462 = vmatpush1.msra.mxu0 %v1160
        %1463 = vmatprep.subr.mxu0 0.0
        %1464 = vmatpush1.msra.mxu0 %v1161
        %1465 = vmatprep.subr.mxu0 0.0
        %1466 = vmatpush1.msra.mxu0 %v1162
        %1467 = vmatprep.subr.mxu0 0.0
        %1468 = vmatpush1.msra.mxu0 %v1163
        %1469 = vmatprep.subr.mxu0 0.0
        %1470 = vmatpush1.msra.mxu0 %v1164
        %1471 = vmatprep.subr.mxu0 0.0
        %1472 = vmatpush1.msra.mxu0 %v1165
        %1473 = vmatprep.subr.mxu0 0.0
        %1474 = vmatpush1.msra.mxu0 %v1166
        %1475 = vmatprep.subr.mxu0 0.0
        %1476 = vmatpush1.msra.mxu0 %v1167
        %1477 = vmatprep.subr.mxu0 0.0
        %1478 = vmatpush1.msra.mxu0 %v1453
        %1479 = vmatprep.subr.mxu0 0.0
        %1480 = vmatpush1.msra.mxu0 0.0
        %1481 = vmatprep.subr.mxu0 0.0
        %1482 = vmatpush1.msra.mxu0 0.0
        %1483 = vmatprep.subr.mxu0 0.0
        %1484 = vmatpush1.msra.mxu0 0.0
        %1485 = vmatprep.subr.mxu0 0.0
        %1486 = vmatpush1.msra.mxu0 0.0
        %1487 = vmatprep.subr.mxu0 0.0
        %1488 = vmatpush1.msra.mxu0 0.0
        %1489 = vmatprep.subr.mxu0 0.0
        %1490 = vmatpush1.msra.mxu0 0.0
        %1491 = vmatprep.subr.mxu0 0.0
        %1492 = vmatpush1.msra.mxu0 0.0
        %1493 = vmatprep.subr.mxu0 0.0
        %1494 = vmatpush1.msra.mxu0 0.0
        %1495 = vmatprep.subr.mxu0 0.0
        %1496 = vmatpush1.msra.mxu0 0.0
        %1497 = vmatprep.subr.mxu0 0.0
        %1498 = vmatpush1.msra.mxu0 0.0
        %1499 = vmatprep.subr.mxu0 0.0
        %1500 = vmatpush1.msra.mxu0 0.0
        %1501 = vmatprep.subr.mxu0 0.0
        %1502 = vmatpush1.msra.mxu0 0.0
        %1503 = vmatprep.subr.mxu0 0.0
        %1504 = vmatpush1.msra.mxu0 0.0
        %1505 = vmatprep.subr.mxu0 0.0
        %1506 = vmatpush1.msra.mxu0 0.0
        %1507 = vmatprep.subr.mxu0 0.0
        %1508 = vmatpush1.msra.mxu0 0.0
        %1509 = vmatprep.subr.mxu0 0.0
        %1510 = vmatpush1.msra.mxu0 0.0
        %1511 = vmatprep.subr.mxu0 0.0
        %1512 = vmatpush1.msra.mxu0 0.0
        %1513 = vmatprep.subr.mxu0 0.0
        %1514 = vmatpush1.msra.mxu0 0.0
        %1515 = vmatprep.subr.mxu0 0.0
        %1516 = vmatpush1.msra.mxu0 0.0
        %1517 = vmatprep.subr.mxu0 0.0
        %1518 = vmatpush1.msra.mxu0 0.0
        %1519 = vmatprep.mubr.f32.mxu0 0.0
        %1520 = vmatmul.mubr.f32.gmra.mrb[0].mxu0 %v1278
        %v1521 = vpop.f32.mrb[0].mxu0
        %v1522 = vadd.f32 %v1444, %v1521
        %v1523 = vpop.f32.mrb[0].mxu0
        %1524 = vmatprep.mubr.f32.mxu0 0.0
        %1525 = vmatmul.mubr.f32.gmra.mrb[0].mxu0 %v1281
        %v1526 = vpop.f32.mrb[0].mxu0
        %v1527 = vadd.f32 %v1449, %v1526
        %v1528 = vpop.f32.mrb[0].mxu0
        %1529 = vdwg.mxu0
        %s1530 = scalar_lea.vmem [#allocation2], 4
        %v1531 = vld [vmem:[%s1530] ss:$2 sm:$0xff]
        %s1532 = scalar_lea.vmem [#allocation2], 20
        %v1533 = vld [vmem:[%s1532] ss:$2 sm:$0x1f]
        %s1534 = scalar_lea.vmem [#allocation2], 5
        %v1535 = vld [vmem:[%s1534] ss:$2 sm:$0xff]
        %s1536 = scalar_lea.vmem [#allocation2], 21
        %v1537 = vld [vmem:[%s1536] ss:$2 sm:$0x1f]
        %v1538 = vmax.f32 %v1531, %v1535
        %v1539 = vmax.f32 %v1533, %v1537
        %s1540 = scalar_lea.vmem %s4, 192
        %v1541 = vld [vmem:[%s1540] sm:$0xff]
        %v1542 = vld [vmem:[%s1540 + $0x8] sm:$0xff]
        %v1543 = vld [vmem:[%s1540 + $0x10] sm:$0xff]
        %v1544 = vld [vmem:[%s1540 + $0x18] sm:$0xff]
        %v1545 = vld [vmem:[%s1540 + $0x20] sm:$0xff]
        %v1546 = vld [vmem:[%s1540 + $0x28] sm:$0xff]
        %v1547 = vld [vmem:[%s1540 + $0x30] sm:$0xff]
        %v1548 = vld [vmem:[%s1540 + $0x38] sm:$0xff]
        %v1549 = vld [vmem:[%s1540 + $0x40] sm:$0xff]
        %v1550 = vld [vmem:[%s1540 + $0x48] sm:$0xff]
        %v1551 = vld [vmem:[%s1540 + $0x50] sm:$0xff]
        %v1552 = vld [vmem:[%s1540 + $0x58] sm:$0x3]
        %v1554 = vsel %vm1130, %v1538, 0
        %v1557 = vsel %vm1130, %v1539, 0
        %v1560 = vsel %vm1198, %v1552, 0
        %1562 = vmatprep.subr.mxu0 0.0
        %1563 = vmatpush1.msra.mxu0 %v1541
        %1564 = vmatprep.subr.mxu0 0.0
        %1565 = vmatpush1.msra.mxu0 %v1542
        %1566 = vmatprep.subr.mxu0 0.0
        %1567 = vmatpush1.msra.mxu0 %v1543
        %1568 = vmatprep.subr.mxu0 0.0
        %1569 = vmatpush1.msra.mxu0 %v1544
        %1570 = vmatprep.subr.mxu0 0.0
        %1571 = vmatpush1.msra.mxu0 %v1545
        %1572 = vmatprep.subr.mxu0 0.0
        %1573 = vmatpush1.msra.mxu0 %v1546
        %1574 = vmatprep.subr.mxu0 0.0
        %1575 = vmatpush1.msra.mxu0 %v1547
        %1576 = vmatprep.subr.mxu0 0.0
        %1577 = vmatpush1.msra.mxu0 %v1548
        %1578 = vmatprep.subr.mxu0 0.0
        %1579 = vmatpush1.msra.mxu0 %v1549
        %1580 = vmatprep.subr.mxu0 0.0
        %1581 = vmatpush1.msra.mxu0 %v1550
        %1582 = vmatprep.subr.mxu0 0.0
        %1583 = vmatpush1.msra.mxu0 %v1551
        %1584 = vmatprep.subr.mxu0 0.0
        %1585 = vmatpush1.msra.mxu0 %v1560
        %1586 = vmatprep.subr.mxu0 0.0
        %1587 = vmatpush1.msra.mxu0 0.0
        %1588 = vmatprep.subr.mxu0 0.0
        %1589 = vmatpush1.msra.mxu0 0.0
        %1590 = vmatprep.subr.mxu0 0.0
        %1591 = vmatpush1.msra.mxu0 0.0
        %1592 = vmatprep.subr.mxu0 0.0
        %1593 = vmatpush1.msra.mxu0 0.0
        %1594 = vmatprep.subr.mxu0 0.0
        %1595 = vmatpush1.msra.mxu0 0.0
        %1596 = vmatprep.subr.mxu0 0.0
        %1597 = vmatpush1.msra.mxu0 0.0
        %1598 = vmatprep.subr.mxu0 0.0
        %1599 = vmatpush1.msra.mxu0 0.0
        %1600 = vmatprep.subr.mxu0 0.0
        %1601 = vmatpush1.msra.mxu0 0.0
        %1602 = vmatprep.subr.mxu0 0.0
        %1603 = vmatpush1.msra.mxu0 0.0
        %1604 = vmatprep.subr.mxu0 0.0
        %1605 = vmatpush1.msra.mxu0 0.0
        %1606 = vmatprep.subr.mxu0 0.0
        %1607 = vmatpush1.msra.mxu0 0.0
        %1608 = vmatprep.subr.mxu0 0.0
        %1609 = vmatpush1.msra.mxu0 0.0
        %1610 = vmatprep.subr.mxu0 0.0
        %1611 = vmatpush1.msra.mxu0 0.0
        %1612 = vmatprep.subr.mxu0 0.0
        %1613 = vmatpush1.msra.mxu0 0.0
        %1614 = vmatprep.subr.mxu0 0.0
        %1615 = vmatpush1.msra.mxu0 0.0
        %1616 = vmatprep.subr.mxu0 0.0
        %1617 = vmatpush1.msra.mxu0 0.0
        %1618 = vmatprep.subr.mxu0 0.0
        %1619 = vmatpush1.msra.mxu0 0.0
        %1620 = vmatprep.subr.mxu0 0.0
        %1621 = vmatpush1.msra.mxu0 0.0
        %1622 = vmatprep.subr.mxu0 0.0
        %1623 = vmatpush1.msra.mxu0 0.0
        %1624 = vmatprep.subr.mxu0 0.0
        %1625 = vmatpush1.msra.mxu0 0.0
        %1626 = vmatprep.mubr.f32.mxu0 0.0
        %1627 = vmatmul.mubr.f32.gmra.mrb[0].mxu0 %v1554
        %v1628 = vpop.f32.mrb[0].mxu0
        %v1629 = vadd.f32 0.0, %v1628
        %v1630 = vpop.f32.mrb[0].mxu0
        %1631 = vmatprep.mubr.f32.mxu0 0.0
        %1632 = vmatmul.mubr.f32.gmra.mrb[0].mxu0 %v1557
        %v1633 = vpop.f32.mrb[0].mxu0
        %v1634 = vadd.f32 0.0, %v1633
        %v1635 = vpop.f32.mrb[0].mxu0
        %1636 = vdwg.mxu0
        %v1637 = vadd.f32 %v1353, %v1629
        %v1638 = vadd.f32 %v1358, %v1634
        %s1639 = scalar_lea.vmem [#allocation10], 192
        %v1640 = vld [vmem:[%s1639] sm:$0xff]
        %v1641 = vld [vmem:[%s1639 + $0x8] sm:$0xff]
        %v1642 = vld [vmem:[%s1639 + $0x10] sm:$0xff]
        %v1643 = vld [vmem:[%s1639 + $0x18] sm:$0xff]
        %v1644 = vld [vmem:[%s1639 + $0x20] sm:$0xff]
        %v1645 = vld [vmem:[%s1639 + $0x28] sm:$0xff]
        %v1646 = vld [vmem:[%s1639 + $0x30] sm:$0xff]
        %v1647 = vld [vmem:[%s1639 + $0x38] sm:$0xff]
        %v1648 = vld [vmem:[%s1639 + $0x40] sm:$0xff]
        %v1649 = vld [vmem:[%s1639 + $0x48] sm:$0xff]
        %v1650 = vld [vmem:[%s1639 + $0x50] sm:$0xff]
        %v1651 = vld [vmem:[%s1639 + $0x58] sm:$0x3]
        %v1653 = vsel %vm1198, %v1651, 0
        %1655 = vmatprep.subr.mxu0 0.0
        %1656 = vmatpush1.msra.mxu0 %v1640
        %1657 = vmatprep.subr.mxu0 0.0
        %1658 = vmatpush1.msra.mxu0 %v1641
        %1659 = vmatprep.subr.mxu0 0.0
        %1660 = vmatpush1.msra.mxu0 %v1642
        %1661 = vmatprep.subr.mxu0 0.0
        %1662 = vmatpush1.msra.mxu0 %v1643
        %1663 = vmatprep.subr.mxu0 0.0
        %1664 = vmatpush1.msra.mxu0 %v1644
        %1665 = vmatprep.subr.mxu0 0.0
        %1666 = vmatpush1.msra.mxu0 %v1645
        %1667 = vmatprep.subr.mxu0 0.0
        %1668 = vmatpush1.msra.mxu0 %v1646
        %1669 = vmatprep.subr.mxu0 0.0
        %1670 = vmatpush1.msra.mxu0 %v1647
        %1671 = vmatprep.subr.mxu0 0.0
        %1672 = vmatpush1.msra.mxu0 %v1648
        %1673 = vmatprep.subr.mxu0 0.0
        %1674 = vmatpush1.msra.mxu0 %v1649
        %1675 = vmatprep.subr.mxu0 0.0
        %1676 = vmatpush1.msra.mxu0 %v1650
        %1677 = vmatprep.subr.mxu0 0.0
        %1678 = vmatpush1.msra.mxu0 %v1653
        %1679 = vmatprep.subr.mxu0 0.0
        %1680 = vmatpush1.msra.mxu0 0.0
        %1681 = vmatprep.subr.mxu0 0.0
        %1682 = vmatpush1.msra.mxu0 0.0
        %1683 = vmatprep.subr.mxu0 0.0
        %1684 = vmatpush1.msra.mxu0 0.0
        %1685 = vmatprep.subr.mxu0 0.0
        %1686 = vmatpush1.msra.mxu0 0.0
        %1687 = vmatprep.subr.mxu0 0.0
        %1688 = vmatpush1.msra.mxu0 0.0
        %1689 = vmatprep.subr.mxu0 0.0
        %1690 = vmatpush1.msra.mxu0 0.0
        %1691 = vmatprep.subr.mxu0 0.0
        %1692 = vmatpush1.msra.mxu0 0.0
        %1693 = vmatprep.subr.mxu0 0.0
        %1694 = vmatpush1.msra.mxu0 0.0
        %1695 = vmatprep.subr.mxu0 0.0
        %1696 = vmatpush1.msra.mxu0 0.0
        %1697 = vmatprep.subr.mxu0 0.0
        %1698 = vmatpush1.msra.mxu0 0.0
        %1699 = vmatprep.subr.mxu0 0.0
        %1700 = vmatpush1.msra.mxu0 0.0
        %1701 = vmatprep.subr.mxu0 0.0
        %1702 = vmatpush1.msra.mxu0 0.0
        %1703 = vmatprep.subr.mxu0 0.0
        %1704 = vmatpush1.msra.mxu0 0.0
        %1705 = vmatprep.subr.mxu0 0.0
        %1706 = vmatpush1.msra.mxu0 0.0
        %1707 = vmatprep.subr.mxu0 0.0
        %1708 = vmatpush1.msra.mxu0 0.0
        %1709 = vmatprep.subr.mxu0 0.0
        %1710 = vmatpush1.msra.mxu0 0.0
        %1711 = vmatprep.subr.mxu0 0.0
        %1712 = vmatpush1.msra.mxu0 0.0
        %1713 = vmatprep.subr.mxu0 0.0
        %1714 = vmatpush1.msra.mxu0 0.0
        %1715 = vmatprep.subr.mxu0 0.0
        %1716 = vmatpush1.msra.mxu0 0.0
        %1717 = vmatprep.subr.mxu0 0.0
        %1718 = vmatpush1.msra.mxu0 0.0
        %1719 = vmatprep.mubr.f32.mxu0 0.0
        %1720 = vmatmul.mubr.f32.gmra.mrb[0].mxu0 %v1554
        %v1721 = vpop.f32.mrb[0].mxu0
        %v1722 = vadd.f32 0.0, %v1721
        %v1723 = vpop.f32.mrb[0].mxu0
        %1724 = vmatprep.mubr.f32.mxu0 0.0
        %1725 = vmatmul.mubr.f32.gmra.mrb[0].mxu0 %v1557
        %v1726 = vpop.f32.mrb[0].mxu0
        %v1727 = vadd.f32 0.0, %v1726
        %v1728 = vpop.f32.mrb[0].mxu0
        %1729 = vdwg.mxu0
        %v1730 = vadd.f32 %v1522, %v1722
        %v1731 = vadd.f32 %v1527, %v1727
        %v1732 = vmax.f32 %v1637, %v1730
        %v1733 = vmax.f32 %v1638, %v1731
        %v1734 = vld [vmem:[%s6] sm:$0x1]
        %v1736 = vlaneseq
        %v1737 = vshrl.u32 %v1736, 7
        %v1738 = vsub.s32 0, %v1737
        %v1739 = vrot.slane %v1734, %v1738
        %v1741 = vadd.f32 %v1732, %v1739
        %v1742 = vadd.f32 %v1733, %v1739
        %v1743 = vmax.f32 %v1741, 0.0
        %v1744 = vmax.f32 %v1742, 0.0
        %vm1745 = vcmask 785408
        %1746 = vst.msk [vmem:[#allocation3] sm:$0xff] %vm1745, %v1743
        %vm1747 = vcmask 782336
        %1748 = vst.msk [vmem:[#allocation3 + $0x8] sm:$0x1f] %vm1747, %v1744
        %v1749 = vld [vmem:[%s8] sm:$0x1]
        %v1750 = vld [vmem:[#allocation3] sm:$0x1]
        %v1751 = vld [vmem:[#allocation3 + $0x1] sm:$0x1]
        %v1752 = vmax.f32 %v1750, %v1751
        %v1753 = vld [vmem:[#allocation12] sm:$0xff]
        %v1754 = vld [vmem:[#allocation12 + $0x8] sm:$0xff]
        %v1755 = vld [vmem:[#allocation12 + $0x10] sm:$0xff]
        %v1756 = vld [vmem:[#allocation12 + $0x18] sm:$0xff]
        %v1757 = vld [vmem:[#allocation12 + $0x20] sm:$0xff]
        %v1758 = vld [vmem:[#allocation12 + $0x28] sm:$0xff]
        %v1759 = vld [vmem:[#allocation12 + $0x30] sm:$0xff]
        %v1760 = vld [vmem:[#allocation12 + $0x38] sm:$0xff]
        %v1761 = vld [vmem:[#allocation12 + $0x40] sm:$0xff]
        %v1762 = vld [vmem:[#allocation12 + $0x48] sm:$0xff]
        %v1763 = vld [vmem:[#allocation12 + $0x50] sm:$0xff]
        %v1764 = vld [vmem:[#allocation12 + $0x58] sm:$0xff]
        %v1766 = vsel %vm1745, %v1752, 0
        %1768 = vmatprep.subr.mxu0 0.0
        %1769 = vmatpush1.msra.mxu0 %v1753
        %1770 = vmatprep.subr.mxu0 0.0
        %1771 = vmatpush1.msra.mxu0 %v1754
        %1772 = vmatprep.subr.mxu0 0.0
        %1773 = vmatpush1.msra.mxu0 %v1755
        %1774 = vmatprep.subr.mxu0 0.0
        %1775 = vmatpush1.msra.mxu0 %v1756
        %1776 = vmatprep.subr.mxu0 0.0
        %1777 = vmatpush1.msra.mxu0 %v1757
        %1778 = vmatprep.subr.mxu0 0.0
        %1779 = vmatpush1.msra.mxu0 %v1758
        %1780 = vmatprep.subr.mxu0 0.0
        %1781 = vmatpush1.msra.mxu0 %v1759
        %1782 = vmatprep.subr.mxu0 0.0
        %1783 = vmatpush1.msra.mxu0 %v1760
        %1784 = vmatprep.subr.mxu0 0.0
        %1785 = vmatpush1.msra.mxu0 %v1761
        %1786 = vmatprep.subr.mxu0 0.0
        %1787 = vmatpush1.msra.mxu0 %v1762
        %1788 = vmatprep.subr.mxu0 0.0
        %1789 = vmatpush1.msra.mxu0 %v1763
        %1790 = vmatprep.subr.mxu0 0.0
        %1791 = vmatpush1.msra.mxu0 %v1764
        %1792 = vmatprep.subr.mxu0 0.0
        %1793 = vmatpush1.msra.mxu0 0.0
        %1794 = vmatprep.subr.mxu0 0.0
        %1795 = vmatpush1.msra.mxu0 0.0
        %1796 = vmatprep.subr.mxu0 0.0
        %1797 = vmatpush1.msra.mxu0 0.0
        %1798 = vmatprep.subr.mxu0 0.0
        %1799 = vmatpush1.msra.mxu0 0.0
        %1800 = vmatprep.subr.mxu0 0.0
        %1801 = vmatpush1.msra.mxu0 0.0
        %1802 = vmatprep.subr.mxu0 0.0
        %1803 = vmatpush1.msra.mxu0 0.0
        %1804 = vmatprep.subr.mxu0 0.0
        %1805 = vmatpush1.msra.mxu0 0.0
        %1806 = vmatprep.subr.mxu0 0.0
        %1807 = vmatpush1.msra.mxu0 0.0
        %1808 = vmatprep.subr.mxu0 0.0
        %1809 = vmatpush1.msra.mxu0 0.0
        %1810 = vmatprep.subr.mxu0 0.0
        %1811 = vmatpush1.msra.mxu0 0.0
        %1812 = vmatprep.subr.mxu0 0.0
        %1813 = vmatpush1.msra.mxu0 0.0
        %1814 = vmatprep.subr.mxu0 0.0
        %1815 = vmatpush1.msra.mxu0 0.0
        %1816 = vmatprep.subr.mxu0 0.0
        %1817 = vmatpush1.msra.mxu0 0.0
        %1818 = vmatprep.subr.mxu0 0.0
        %1819 = vmatpush1.msra.mxu0 0.0
        %1820 = vmatprep.subr.mxu0 0.0
        %1821 = vmatpush1.msra.mxu0 0.0
        %1822 = vmatprep.subr.mxu0 0.0
        %1823 = vmatpush1.msra.mxu0 0.0
        %1824 = vmatprep.subr.mxu0 0.0
        %1825 = vmatpush1.msra.mxu0 0.0
        %1826 = vmatprep.subr.mxu0 0.0
        %1827 = vmatpush1.msra.mxu0 0.0
        %1828 = vmatprep.subr.mxu0 0.0
        %1829 = vmatpush1.msra.mxu0 0.0
        %1830 = vmatprep.subr.mxu0 0.0
        %1831 = vmatpush1.msra.mxu0 0.0
        %1832 = vmatprep.mubr.f32.mxu0 0.0
        %1833 = vmatmul.mubr.f32.gmra.mrb[0].mxu0 %v1766
        %v1834 = vpop.f32.mrb[0].mxu0
        %v1835 = vadd.f32 0.0, %v1834
        %v1836 = vpop.f32.mrb[0].mxu0
        %1837 = vdwg.mxu0
        %v1838 = vadd.f32 %v1749, %v1835
        %v1839 = vld [vmem:[#allocation3 + $0x2] sm:$0x1]
        %v1840 = vld [vmem:[#allocation3 + $0x3] sm:$0x1]
        %v1841 = vmax.f32 %v1839, %v1840
        %s1842 = scalar_lea.vmem [#allocation12], 96
        %v1843 = vld [vmem:[%s1842] sm:$0xff]
        %v1844 = vld [vmem:[%s1842 + $0x8] sm:$0xff]
        %v1845 = vld [vmem:[%s1842 + $0x10] sm:$0xff]
        %v1846 = vld [vmem:[%s1842 + $0x18] sm:$0xff]
        %v1847 = vld [vmem:[%s1842 + $0x20] sm:$0xff]
        %v1848 = vld [vmem:[%s1842 + $0x28] sm:$0xff]
        %v1849 = vld [vmem:[%s1842 + $0x30] sm:$0xff]
        %v1850 = vld [vmem:[%s1842 + $0x38] sm:$0xff]
        %v1851 = vld [vmem:[%s1842 + $0x40] sm:$0xff]
        %v1852 = vld [vmem:[%s1842 + $0x48] sm:$0xff]
        %v1853 = vld [vmem:[%s1842 + $0x50] sm:$0xff]
        %v1854 = vld [vmem:[%s1842 + $0x58] sm:$0xff]
        %v1856 = vsel %vm1745, %v1841, 0
        %1858 = vmatprep.subr.mxu0 0.0
        %1859 = vmatpush1.msra.mxu0 %v1843
        %1860 = vmatprep.subr.mxu0 0.0
        %1861 = vmatpush1.msra.mxu0 %v1844
        %1862 = vmatprep.subr.mxu0 0.0
        %1863 = vmatpush1.msra.mxu0 %v1845
        %1864 = vmatprep.subr.mxu0 0.0
        %1865 = vmatpush1.msra.mxu0 %v1846
        %1866 = vmatprep.subr.mxu0 0.0
        %1867 = vmatpush1.msra.mxu0 %v1847
        %1868 = vmatprep.subr.mxu0 0.0
        %1869 = vmatpush1.msra.mxu0 %v1848
        %1870 = vmatprep.subr.mxu0 0.0
        %1871 = vmatpush1.msra.mxu0 %v1849
        %1872 = vmatprep.subr.mxu0 0.0
        %1873 = vmatpush1.msra.mxu0 %v1850
        %1874 = vmatprep.subr.mxu0 0.0
        %1875 = vmatpush1.msra.mxu0 %v1851
        %1876 = vmatprep.subr.mxu0 0.0
        %1877 = vmatpush1.msra.mxu0 %v1852
        %1878 = vmatprep.subr.mxu0 0.0
        %1879 = vmatpush1.msra.mxu0 %v1853
        %1880 = vmatprep.subr.mxu0 0.0
        %1881 = vmatpush1.msra.mxu0 %v1854
        %1882 = vmatprep.subr.mxu0 0.0
        %1883 = vmatpush1.msra.mxu0 0.0
        %1884 = vmatprep.subr.mxu0 0.0
        %1885 = vmatpush1.msra.mxu0 0.0
        %1886 = vmatprep.subr.mxu0 0.0
        %1887 = vmatpush1.msra.mxu0 0.0
        %1888 = vmatprep.subr.mxu0 0.0
        %1889 = vmatpush1.msra.mxu0 0.0
        %1890 = vmatprep.subr.mxu0 0.0
        %1891 = vmatpush1.msra.mxu0 0.0
        %1892 = vmatprep.subr.mxu0 0.0
        %1893 = vmatpush1.msra.mxu0 0.0
        %1894 = vmatprep.subr.mxu0 0.0
        %1895 = vmatpush1.msra.mxu0 0.0
        %1896 = vmatprep.subr.mxu0 0.0
        %1897 = vmatpush1.msra.mxu0 0.0
        %1898 = vmatprep.subr.mxu0 0.0
        %1899 = vmatpush1.msra.mxu0 0.0
        %1900 = vmatprep.subr.mxu0 0.0
        %1901 = vmatpush1.msra.mxu0 0.0
        %1902 = vmatprep.subr.mxu0 0.0
        %1903 = vmatpush1.msra.mxu0 0.0
        %1904 = vmatprep.subr.mxu0 0.0
        %1905 = vmatpush1.msra.mxu0 0.0
        %1906 = vmatprep.subr.mxu0 0.0
        %1907 = vmatpush1.msra.mxu0 0.0
        %1908 = vmatprep.subr.mxu0 0.0
        %1909 = vmatpush1.msra.mxu0 0.0
        %1910 = vmatprep.subr.mxu0 0.0
        %1911 = vmatpush1.msra.mxu0 0.0
        %1912 = vmatprep.subr.mxu0 0.0
        %1913 = vmatpush1.msra.mxu0 0.0
        %1914 = vmatprep.subr.mxu0 0.0
        %1915 = vmatpush1.msra.mxu0 0.0
        %1916 = vmatprep.subr.mxu0 0.0
        %1917 = vmatpush1.msra.mxu0 0.0
        %1918 = vmatprep.subr.mxu0 0.0
        %1919 = vmatpush1.msra.mxu0 0.0
        %1920 = vmatprep.subr.mxu0 0.0
        %1921 = vmatpush1.msra.mxu0 0.0
        %1922 = vmatprep.mubr.f32.mxu0 0.0
        %1923 = vmatmul.mubr.f32.gmra.mrb[0].mxu0 %v1856
        %v1924 = vpop.f32.mrb[0].mxu0
        %v1925 = vadd.f32 0.0, %v1924
        %v1926 = vpop.f32.mrb[0].mxu0
        %1927 = vdwg.mxu0
        %v1928 = vadd.f32 %v1838, %v1925
        %v1929 = vld [vmem:[#allocation3 + $0x4] sm:$0x1]
        %v1930 = vld [vmem:[#allocation3 + $0x5] sm:$0x1]
        %v1931 = vmax.f32 %v1929, %v1930
        %s1932 = scalar_lea.vmem [#allocation12], 192
        %v1933 = vld [vmem:[%s1932] sm:$0xff]
        %v1934 = vld [vmem:[%s1932 + $0x8] sm:$0xff]
        %v1935 = vld [vmem:[%s1932 + $0x10] sm:$0xff]
        %v1936 = vld [vmem:[%s1932 + $0x18] sm:$0xff]
        %v1937 = vld [vmem:[%s1932 + $0x20] sm:$0xff]
        %v1938 = vld [vmem:[%s1932 + $0x28] sm:$0xff]
        %v1939 = vld [vmem:[%s1932 + $0x30] sm:$0xff]
        %v1940 = vld [vmem:[%s1932 + $0x38] sm:$0xff]
        %v1941 = vld [vmem:[%s1932 + $0x40] sm:$0xff]
        %v1942 = vld [vmem:[%s1932 + $0x48] sm:$0xff]
        %v1943 = vld [vmem:[%s1932 + $0x50] sm:$0xff]
        %v1944 = vld [vmem:[%s1932 + $0x58] sm:$0xff]
        %v1946 = vsel %vm1745, %v1931, 0
        %1948 = vmatprep.subr.mxu0 0.0
        %1949 = vmatpush1.msra.mxu0 %v1933
        %1950 = vmatprep.subr.mxu0 0.0
        %1951 = vmatpush1.msra.mxu0 %v1934
        %1952 = vmatprep.subr.mxu0 0.0
        %1953 = vmatpush1.msra.mxu0 %v1935
        %1954 = vmatprep.subr.mxu0 0.0
        %1955 = vmatpush1.msra.mxu0 %v1936
        %1956 = vmatprep.subr.mxu0 0.0
        %1957 = vmatpush1.msra.mxu0 %v1937
        %1958 = vmatprep.subr.mxu0 0.0
        %1959 = vmatpush1.msra.mxu0 %v1938
        %1960 = vmatprep.subr.mxu0 0.0
        %1961 = vmatpush1.msra.mxu0 %v1939
        %1962 = vmatprep.subr.mxu0 0.0
        %1963 = vmatpush1.msra.mxu0 %v1940
        %1964 = vmatprep.subr.mxu0 0.0
        %1965 = vmatpush1.msra.mxu0 %v1941
        %1966 = vmatprep.subr.mxu0 0.0
        %1967 = vmatpush1.msra.mxu0 %v1942
        %1968 = vmatprep.subr.mxu0 0.0
        %1969 = vmatpush1.msra.mxu0 %v1943
        %1970 = vmatprep.subr.mxu0 0.0
        %1971 = vmatpush1.msra.mxu0 %v1944
        %1972 = vmatprep.subr.mxu0 0.0
        %1973 = vmatpush1.msra.mxu0 0.0
        %1974 = vmatprep.subr.mxu0 0.0
        %1975 = vmatpush1.msra.mxu0 0.0
        %1976 = vmatprep.subr.mxu0 0.0
        %1977 = vmatpush1.msra.mxu0 0.0
        %1978 = vmatprep.subr.mxu0 0.0
        %1979 = vmatpush1.msra.mxu0 0.0
        %1980 = vmatprep.subr.mxu0 0.0
        %1981 = vmatpush1.msra.mxu0 0.0
        %1982 = vmatprep.subr.mxu0 0.0
        %1983 = vmatpush1.msra.mxu0 0.0
        %1984 = vmatprep.subr.mxu0 0.0
        %1985 = vmatpush1.msra.mxu0 0.0
        %1986 = vmatprep.subr.mxu0 0.0
        %1987 = vmatpush1.msra.mxu0 0.0
        %1988 = vmatprep.subr.mxu0 0.0
        %1989 = vmatpush1.msra.mxu0 0.0
        %1990 = vmatprep.subr.mxu0 0.0
        %1991 = vmatpush1.msra.mxu0 0.0
        %1992 = vmatprep.subr.mxu0 0.0
        %1993 = vmatpush1.msra.mxu0 0.0
        %1994 = vmatprep.subr.mxu0 0.0
        %1995 = vmatpush1.msra.mxu0 0.0
        %1996 = vmatprep.subr.mxu0 0.0
        %1997 = vmatpush1.msra.mxu0 0.0
        %1998 = vmatprep.subr.mxu0 0.0
        %1999 = vmatpush1.msra.mxu0 0.0
        %2000 = vmatprep.subr.mxu0 0.0
        %2001 = vmatpush1.msra.mxu0 0.0
        %2002 = vmatprep.subr.mxu0 0.0
        %2003 = vmatpush1.msra.mxu0 0.0
        %2004 = vmatprep.subr.mxu0 0.0
        %2005 = vmatpush1.msra.mxu0 0.0
        %2006 = vmatprep.subr.mxu0 0.0
        %2007 = vmatpush1.msra.mxu0 0.0
        %2008 = vmatprep.subr.mxu0 0.0
        %2009 = vmatpush1.msra.mxu0 0.0
        %2010 = vmatprep.subr.mxu0 0.0
        %2011 = vmatpush1.msra.mxu0 0.0
        %2012 = vmatprep.mubr.f32.mxu0 0.0
        %2013 = vmatmul.mubr.f32.gmra.mrb[0].mxu0 %v1946
        %v2014 = vpop.f32.mrb[0].mxu0
        %v2015 = vadd.f32 0.0, %v2014
        %v2016 = vpop.f32.mrb[0].mxu0
        %2017 = vdwg.mxu0
        %v2018 = vadd.f32 %v1928, %v2015
        %v2019 = vld [vmem:[#allocation3 + $0x6] sm:$0x1]
        %v2020 = vld [vmem:[#allocation3 + $0x7] sm:$0x1]
        %v2021 = vmax.f32 %v2019, %v2020
        %s2022 = scalar_lea.vmem [#allocation12], 288
        %v2023 = vld [vmem:[%s2022] sm:$0xff]
        %v2024 = vld [vmem:[%s2022 + $0x8] sm:$0xff]
        %v2025 = vld [vmem:[%s2022 + $0x10] sm:$0xff]
        %v2026 = vld [vmem:[%s2022 + $0x18] sm:$0xff]
        %v2027 = vld [vmem:[%s2022 + $0x20] sm:$0xff]
        %v2028 = vld [vmem:[%s2022 + $0x28] sm:$0xff]
        %v2029 = vld [vmem:[%s2022 + $0x30] sm:$0xff]
        %v2030 = vld [vmem:[%s2022 + $0x38] sm:$0xff]
        %v2031 = vld [vmem:[%s2022 + $0x40] sm:$0xff]
        %v2032 = vld [vmem:[%s2022 + $0x48] sm:$0xff]
        %v2033 = vld [vmem:[%s2022 + $0x50] sm:$0xff]
        %v2034 = vld [vmem:[%s2022 + $0x58] sm:$0xff]
        %v2036 = vsel %vm1745, %v2021, 0
        %2038 = vmatprep.subr.mxu0 0.0
        %2039 = vmatpush1.msra.mxu0 %v2023
        %2040 = vmatprep.subr.mxu0 0.0
        %2041 = vmatpush1.msra.mxu0 %v2024
        %2042 = vmatprep.subr.mxu0 0.0
        %2043 = vmatpush1.msra.mxu0 %v2025
        %2044 = vmatprep.subr.mxu0 0.0
        %2045 = vmatpush1.msra.mxu0 %v2026
        %2046 = vmatprep.subr.mxu0 0.0
        %2047 = vmatpush1.msra.mxu0 %v2027
        %2048 = vmatprep.subr.mxu0 0.0
        %2049 = vmatpush1.msra.mxu0 %v2028
        %2050 = vmatprep.subr.mxu0 0.0
        %2051 = vmatpush1.msra.mxu0 %v2029
        %2052 = vmatprep.subr.mxu0 0.0
        %2053 = vmatpush1.msra.mxu0 %v2030
        %2054 = vmatprep.subr.mxu0 0.0
        %2055 = vmatpush1.msra.mxu0 %v2031
        %2056 = vmatprep.subr.mxu0 0.0
        %2057 = vmatpush1.msra.mxu0 %v2032
        %2058 = vmatprep.subr.mxu0 0.0
        %2059 = vmatpush1.msra.mxu0 %v2033
        %2060 = vmatprep.subr.mxu0 0.0
        %2061 = vmatpush1.msra.mxu0 %v2034
        %2062 = vmatprep.subr.mxu0 0.0
        %2063 = vmatpush1.msra.mxu0 0.0
        %2064 = vmatprep.subr.mxu0 0.0
        %2065 = vmatpush1.msra.mxu0 0.0
        %2066 = vmatprep.subr.mxu0 0.0
        %2067 = vmatpush1.msra.mxu0 0.0
        %2068 = vmatprep.subr.mxu0 0.0
        %2069 = vmatpush1.msra.mxu0 0.0
        %2070 = vmatprep.subr.mxu0 0.0
        %2071 = vmatpush1.msra.mxu0 0.0
        %2072 = vmatprep.subr.mxu0 0.0
        %2073 = vmatpush1.msra.mxu0 0.0
        %2074 = vmatprep.subr.mxu0 0.0
        %2075 = vmatpush1.msra.mxu0 0.0
        %2076 = vmatprep.subr.mxu0 0.0
        %2077 = vmatpush1.msra.mxu0 0.0
        %2078 = vmatprep.subr.mxu0 0.0
        %2079 = vmatpush1.msra.mxu0 0.0
        %2080 = vmatprep.subr.mxu0 0.0
        %2081 = vmatpush1.msra.mxu0 0.0
        %2082 = vmatprep.subr.mxu0 0.0
        %2083 = vmatpush1.msra.mxu0 0.0
        %2084 = vmatprep.subr.mxu0 0.0
        %2085 = vmatpush1.msra.mxu0 0.0
        %2086 = vmatprep.subr.mxu0 0.0
        %2087 = vmatpush1.msra.mxu0 0.0
        %2088 = vmatprep.subr.mxu0 0.0
        %2089 = vmatpush1.msra.mxu0 0.0
        %2090 = vmatprep.subr.mxu0 0.0
        %2091 = vmatpush1.msra.mxu0 0.0
        %2092 = vmatprep.subr.mxu0 0.0
        %2093 = vmatpush1.msra.mxu0 0.0
        %2094 = vmatprep.subr.mxu0 0.0
        %2095 = vmatpush1.msra.mxu0 0.0
        %2096 = vmatprep.subr.mxu0 0.0
        %2097 = vmatpush1.msra.mxu0 0.0
        %2098 = vmatprep.subr.mxu0 0.0
        %2099 = vmatpush1.msra.mxu0 0.0
        %2100 = vmatprep.subr.mxu0 0.0
        %2101 = vmatpush1.msra.mxu0 0.0
        %2102 = vmatprep.mubr.f32.mxu0 0.0
        %2103 = vmatmul.mubr.f32.gmra.mrb[0].mxu0 %v2036
        %v2104 = vpop.f32.mrb[0].mxu0
        %v2105 = vadd.f32 0.0, %v2104
        %v2106 = vpop.f32.mrb[0].mxu0
        %2107 = vdwg.mxu0
        %v2108 = vadd.f32 %v2018, %v2105
        %v2109 = vld [vmem:[#allocation3 + $0x8] sm:$0x1]
        %v2110 = vld [vmem:[#allocation3 + $0x9] sm:$0x1]
        %v2111 = vmax.f32 %v2109, %v2110
        %s2112 = scalar_lea.vmem [#allocation12], 384
        %v2113 = vld [vmem:[%s2112] sm:$0xff]
        %v2114 = vld [vmem:[%s2112 + $0x8] sm:$0xff]
        %v2115 = vld [vmem:[%s2112 + $0x10] sm:$0xff]
        %v2116 = vld [vmem:[%s2112 + $0x18] sm:$0xff]
        %v2117 = vld [vmem:[%s2112 + $0x20] sm:$0xff]
        %v2118 = vld [vmem:[%s2112 + $0x28] sm:$0xff]
        %v2119 = vld [vmem:[%s2112 + $0x30] sm:$0xff]
        %v2120 = vld [vmem:[%s2112 + $0x38] sm:$0xff]
        %v2121 = vld [vmem:[%s2112 + $0x40] sm:$0xff]
        %v2122 = vld [vmem:[%s2112 + $0x48] sm:$0xff]
        %v2123 = vld [vmem:[%s2112 + $0x50] sm:$0xff]
        %v2124 = vld [vmem:[%s2112 + $0x58] sm:$0xff]
        %v2126 = vsel %vm1745, %v2111, 0
        %2128 = vmatprep.subr.mxu0 0.0
        %2129 = vmatpush1.msra.mxu0 %v2113
        %2130 = vmatprep.subr.mxu0 0.0
        %2131 = vmatpush1.msra.mxu0 %v2114
        %2132 = vmatprep.subr.mxu0 0.0
        %2133 = vmatpush1.msra.mxu0 %v2115
        %2134 = vmatprep.subr.mxu0 0.0
        %2135 = vmatpush1.msra.mxu0 %v2116
        %2136 = vmatprep.subr.mxu0 0.0
        %2137 = vmatpush1.msra.mxu0 %v2117
        %2138 = vmatprep.subr.mxu0 0.0
        %2139 = vmatpush1.msra.mxu0 %v2118
        %2140 = vmatprep.subr.mxu0 0.0
        %2141 = vmatpush1.msra.mxu0 %v2119
        %2142 = vmatprep.subr.mxu0 0.0
        %2143 = vmatpush1.msra.mxu0 %v2120
        %2144 = vmatprep.subr.mxu0 0.0
        %2145 = vmatpush1.msra.mxu0 %v2121
        %2146 = vmatprep.subr.mxu0 0.0
        %2147 = vmatpush1.msra.mxu0 %v2122
        %2148 = vmatprep.subr.mxu0 0.0
        %2149 = vmatpush1.msra.mxu0 %v2123
        %2150 = vmatprep.subr.mxu0 0.0
        %2151 = vmatpush1.msra.mxu0 %v2124
        %2152 = vmatprep.subr.mxu0 0.0
        %2153 = vmatpush1.msra.mxu0 0.0
        %2154 = vmatprep.subr.mxu0 0.0
        %2155 = vmatpush1.msra.mxu0 0.0
        %2156 = vmatprep.subr.mxu0 0.0
        %2157 = vmatpush1.msra.mxu0 0.0
        %2158 = vmatprep.subr.mxu0 0.0
        %2159 = vmatpush1.msra.mxu0 0.0
        %2160 = vmatprep.subr.mxu0 0.0
        %2161 = vmatpush1.msra.mxu0 0.0
        %2162 = vmatprep.subr.mxu0 0.0
        %2163 = vmatpush1.msra.mxu0 0.0
        %2164 = vmatprep.subr.mxu0 0.0
        %2165 = vmatpush1.msra.mxu0 0.0
        %2166 = vmatprep.subr.mxu0 0.0
        %2167 = vmatpush1.msra.mxu0 0.0
        %2168 = vmatprep.subr.mxu0 0.0
        %2169 = vmatpush1.msra.mxu0 0.0
        %2170 = vmatprep.subr.mxu0 0.0
        %2171 = vmatpush1.msra.mxu0 0.0
        %2172 = vmatprep.subr.mxu0 0.0
        %2173 = vmatpush1.msra.mxu0 0.0
        %2174 = vmatprep.subr.mxu0 0.0
        %2175 = vmatpush1.msra.mxu0 0.0
        %2176 = vmatprep.subr.mxu0 0.0
        %2177 = vmatpush1.msra.mxu0 0.0
        %2178 = vmatprep.subr.mxu0 0.0
        %2179 = vmatpush1.msra.mxu0 0.0
        %2180 = vmatprep.subr.mxu0 0.0
        %2181 = vmatpush1.msra.mxu0 0.0
        %2182 = vmatprep.subr.mxu0 0.0
        %2183 = vmatpush1.msra.mxu0 0.0
        %2184 = vmatprep.subr.mxu0 0.0
        %2185 = vmatpush1.msra.mxu0 0.0
        %2186 = vmatprep.subr.mxu0 0.0
        %2187 = vmatpush1.msra.mxu0 0.0
        %2188 = vmatprep.subr.mxu0 0.0
        %2189 = vmatpush1.msra.mxu0 0.0
        %2190 = vmatprep.subr.mxu0 0.0
        %2191 = vmatpush1.msra.mxu0 0.0
        %2192 = vmatprep.mubr.f32.mxu0 0.0
        %2193 = vmatmul.mubr.f32.gmra.mrb[0].mxu0 %v2126
        %v2194 = vpop.f32.mrb[0].mxu0
        %v2195 = vadd.f32 0.0, %v2194
        %v2196 = vpop.f32.mrb[0].mxu0
        %2197 = vdwg.mxu0
        %v2198 = vadd.f32 %v2108, %v2195
        %v2199 = vld [vmem:[#allocation3 + $0xa] sm:$0x1]
        %v2200 = vld [vmem:[#allocation3 + $0xb] sm:$0x1]
        %v2201 = vmax.f32 %v2199, %v2200
        %s2202 = scalar_lea.vmem [#allocation12], 480
        %v2203 = vld [vmem:[%s2202] sm:$0xff]
        %v2204 = vld [vmem:[%s2202 + $0x8] sm:$0xff]
        %v2205 = vld [vmem:[%s2202 + $0x10] sm:$0xff]
        %v2206 = vld [vmem:[%s2202 + $0x18] sm:$0xff]
        %v2207 = vld [vmem:[%s2202 + $0x20] sm:$0xff]
        %v2208 = vld [vmem:[%s2202 + $0x28] sm:$0xff]
        %v2209 = vld [vmem:[%s2202 + $0x30] sm:$0xff]
        %v2210 = vld [vmem:[%s2202 + $0x38] sm:$0xff]
        %v2211 = vld [vmem:[%s2202 + $0x40] sm:$0xff]
        %v2212 = vld [vmem:[%s2202 + $0x48] sm:$0xff]
        %v2213 = vld [vmem:[%s2202 + $0x50] sm:$0xff]
        %v2214 = vld [vmem:[%s2202 + $0x58] sm:$0xff]
        %v2216 = vsel %vm1745, %v2201, 0
        %2218 = vmatprep.subr.mxu0 0.0
        %2219 = vmatpush1.msra.mxu0 %v2203
        %2220 = vmatprep.subr.mxu0 0.0
        %2221 = vmatpush1.msra.mxu0 %v2204
        %2222 = vmatprep.subr.mxu0 0.0
        %2223 = vmatpush1.msra.mxu0 %v2205
        %2224 = vmatprep.subr.mxu0 0.0
        %2225 = vmatpush1.msra.mxu0 %v2206
        %2226 = vmatprep.subr.mxu0 0.0
        %2227 = vmatpush1.msra.mxu0 %v2207
        %2228 = vmatprep.subr.mxu0 0.0
        %2229 = vmatpush1.msra.mxu0 %v2208
        %2230 = vmatprep.subr.mxu0 0.0
        %2231 = vmatpush1.msra.mxu0 %v2209
        %2232 = vmatprep.subr.mxu0 0.0
        %2233 = vmatpush1.msra.mxu0 %v2210
        %2234 = vmatprep.subr.mxu0 0.0
        %2235 = vmatpush1.msra.mxu0 %v2211
        %2236 = vmatprep.subr.mxu0 0.0
        %2237 = vmatpush1.msra.mxu0 %v2212
        %2238 = vmatprep.subr.mxu0 0.0
        %2239 = vmatpush1.msra.mxu0 %v2213
        %2240 = vmatprep.subr.mxu0 0.0
        %2241 = vmatpush1.msra.mxu0 %v2214
        %2242 = vmatprep.subr.mxu0 0.0
        %2243 = vmatpush1.msra.mxu0 0.0
        %2244 = vmatprep.subr.mxu0 0.0
        %2245 = vmatpush1.msra.mxu0 0.0
        %2246 = vmatprep.subr.mxu0 0.0
        %2247 = vmatpush1.msra.mxu0 0.0
        %2248 = vmatprep.subr.mxu0 0.0
        %2249 = vmatpush1.msra.mxu0 0.0
        %2250 = vmatprep.subr.mxu0 0.0
        %2251 = vmatpush1.msra.mxu0 0.0
        %2252 = vmatprep.subr.mxu0 0.0
        %2253 = vmatpush1.msra.mxu0 0.0
        %2254 = vmatprep.subr.mxu0 0.0
        %2255 = vmatpush1.msra.mxu0 0.0
        %2256 = vmatprep.subr.mxu0 0.0
        %2257 = vmatpush1.msra.mxu0 0.0
        %2258 = vmatprep.subr.mxu0 0.0
        %2259 = vmatpush1.msra.mxu0 0.0
        %2260 = vmatprep.subr.mxu0 0.0
        %2261 = vmatpush1.msra.mxu0 0.0
        %2262 = vmatprep.subr.mxu0 0.0
        %2263 = vmatpush1.msra.mxu0 0.0
        %2264 = vmatprep.subr.mxu0 0.0
        %2265 = vmatpush1.msra.mxu0 0.0
        %2266 = vmatprep.subr.mxu0 0.0
        %2267 = vmatpush1.msra.mxu0 0.0
        %2268 = vmatprep.subr.mxu0 0.0
        %2269 = vmatpush1.msra.mxu0 0.0
        %2270 = vmatprep.subr.mxu0 0.0
        %2271 = vmatpush1.msra.mxu0 0.0
        %2272 = vmatprep.subr.mxu0 0.0
        %2273 = vmatpush1.msra.mxu0 0.0
        %2274 = vmatprep.subr.mxu0 0.0
        %2275 = vmatpush1.msra.mxu0 0.0
        %2276 = vmatprep.subr.mxu0 0.0
        %2277 = vmatpush1.msra.mxu0 0.0
        %2278 = vmatprep.subr.mxu0 0.0
        %2279 = vmatpush1.msra.mxu0 0.0
        %2280 = vmatprep.subr.mxu0 0.0
        %2281 = vmatpush1.msra.mxu0 0.0
        %2282 = vmatprep.mubr.f32.mxu0 0.0
        %2283 = vmatmul.mubr.f32.gmra.mrb[0].mxu0 %v2216
        %v2284 = vpop.f32.mrb[0].mxu0
        %v2285 = vadd.f32 0.0, %v2284
        %v2286 = vpop.f32.mrb[0].mxu0
        %2287 = vdwg.mxu0
        %v2288 = vadd.f32 %v2198, %v2285
        %v2289 = vmax.f32 %v2288, 0.0
        %v2290 = vld [vmem:[%s9] sm:$0xff]
        %v2291 = vld [vmem:[%s9 + $0x8] sm:$0xff]
        %v2292 = vld [vmem:[%s9 + $0x10] sm:$0xff]
        %v2293 = vld [vmem:[%s9 + $0x18] sm:$0xff]
        %v2294 = vld [vmem:[%s9 + $0x20] sm:$0xff]
        %v2295 = vld [vmem:[%s9 + $0x28] sm:$0xff]
        %v2296 = vld [vmem:[%s9 + $0x30] sm:$0xff]
        %v2297 = vld [vmem:[%s9 + $0x38] sm:$0xff]
        %v2298 = vld [vmem:[%s9 + $0x40] sm:$0xff]
        %v2299 = vld [vmem:[%s9 + $0x48] sm:$0xff]
        %v2300 = vld [vmem:[%s9 + $0x50] sm:$0xff]
        %v2301 = vld [vmem:[%s9 + $0x58] sm:$0xff]
        %v2302 = vld [vmem:[%s9 + $0x60] sm:$0xff]
        %v2303 = vld [vmem:[%s9 + $0x68] sm:$0xff]
        %v2304 = vld [vmem:[%s9 + $0x70] sm:$0xff]
        %v2305 = vld [vmem:[%s10] sm:$0x1]
        %vm2306 = vcmask 982016
        %v2308 = vsel %vm2306, %v2289, 0
        %2310 = vmatprep.subr.mxu0 0.0
        %2311 = vmatpush1.msra.mxu0 %v2290
        %2312 = vmatprep.subr.mxu0 0.0
        %2313 = vmatpush1.msra.mxu0 %v2291
        %2314 = vmatprep.subr.mxu0 0.0
        %2315 = vmatpush1.msra.mxu0 %v2292
        %2316 = vmatprep.subr.mxu0 0.0
        %2317 = vmatpush1.msra.mxu0 %v2293
        %2318 = vmatprep.subr.mxu0 0.0
        %2319 = vmatpush1.msra.mxu0 %v2294
        %2320 = vmatprep.subr.mxu0 0.0
        %2321 = vmatpush1.msra.mxu0 %v2295
        %2322 = vmatprep.subr.mxu0 0.0
        %2323 = vmatpush1.msra.mxu0 %v2296
        %2324 = vmatprep.subr.mxu0 0.0
        %2325 = vmatpush1.msra.mxu0 %v2297
        %2326 = vmatprep.subr.mxu0 0.0
        %2327 = vmatpush1.msra.mxu0 %v2298
        %2328 = vmatprep.subr.mxu0 0.0
        %2329 = vmatpush1.msra.mxu0 %v2299
        %2330 = vmatprep.subr.mxu0 0.0
        %2331 = vmatpush1.msra.mxu0 %v2300
        %2332 = vmatprep.subr.mxu0 0.0
        %2333 = vmatpush1.msra.mxu0 %v2301
        %2334 = vmatprep.subr.mxu0 0.0
        %2335 = vmatpush1.msra.mxu0 %v2302
        %2336 = vmatprep.subr.mxu0 0.0
        %2337 = vmatpush1.msra.mxu0 %v2303
        %2338 = vmatprep.subr.mxu0 0.0
        %2339 = vmatpush1.msra.mxu0 %v2304
        %2340 = vmatprep.subr.mxu0 0.0
        %2341 = vmatpush1.msra.mxu0 0.0
        %2342 = vmatprep.subr.mxu0 0.0
        %2343 = vmatpush1.msra.mxu0 0.0
        %2344 = vmatprep.subr.mxu0 0.0
        %2345 = vmatpush1.msra.mxu0 0.0
        %2346 = vmatprep.subr.mxu0 0.0
        %2347 = vmatpush1.msra.mxu0 0.0
        %2348 = vmatprep.subr.mxu0 0.0
        %2349 = vmatpush1.msra.mxu0 0.0
        %2350 = vmatprep.subr.mxu0 0.0
        %2351 = vmatpush1.msra.mxu0 0.0
        %2352 = vmatprep.subr.mxu0 0.0
        %2353 = vmatpush1.msra.mxu0 0.0
        %2354 = vmatprep.subr.mxu0 0.0
        %2355 = vmatpush1.msra.mxu0 0.0
        %2356 = vmatprep.subr.mxu0 0.0
        %2357 = vmatpush1.msra.mxu0 0.0
        %2358 = vmatprep.subr.mxu0 0.0
        %2359 = vmatpush1.msra.mxu0 0.0
        %2360 = vmatprep.subr.mxu0 0.0
        %2361 = vmatpush1.msra.mxu0 0.0
        %2362 = vmatprep.subr.mxu0 0.0
        %2363 = vmatpush1.msra.mxu0 0.0
        %2364 = vmatprep.subr.mxu0 0.0
        %2365 = vmatpush1.msra.mxu0 0.0
        %2366 = vmatprep.subr.mxu0 0.0
        %2367 = vmatpush1.msra.mxu0 0.0
        %2368 = vmatprep.subr.mxu0 0.0
        %2369 = vmatpush1.msra.mxu0 0.0
        %2370 = vmatprep.subr.mxu0 0.0
        %2371 = vmatpush1.msra.mxu0 0.0
        %2372 = vmatprep.subr.mxu0 0.0
        %2373 = vmatpush1.msra.mxu0 0.0
        %2374 = vmatprep.mubr.f32.mxu0 0.0
        %2375 = vmatmul.mubr.f32.gmra.mrb[0].mxu0 %v2308
        %v2376 = vpop.f32.mrb[0].mxu0
        %v2377 = vadd.f32 %v2305, %v2376
        %v2378 = vpop.f32.mrb[0].mxu0
        %2379 = vdwg.mxu0
        %v2380 = vmax.f32 %v2377, 0.0
        %v2381 = vld [vmem:[%s11] sm:$0xff]
        %v2382 = vld [vmem:[%s11 + $0x8] sm:$0xff]
        %v2383 = vld [vmem:[%s11 + $0x10] sm:$0xff]
        %v2384 = vld [vmem:[%s11 + $0x18] sm:$0xff]
        %v2385 = vld [vmem:[%s11 + $0x20] sm:$0xff]
        %v2386 = vld [vmem:[%s11 + $0x28] sm:$0xff]
        %v2387 = vld [vmem:[%s11 + $0x30] sm:$0xff]
        %v2388 = vld [vmem:[%s11 + $0x38] sm:$0xff]
        %v2389 = vld [vmem:[%s11 + $0x40] sm:$0xff]
        %v2390 = vld [vmem:[%s11 + $0x48] sm:$0xff]
        %v2391 = vld [vmem:[%s11 + $0x50] sm:$0xf]
        %v2392 = vld [vmem:[%s12] sm:$0x1]
        %vm2393 = vcmask 687104
        %v2395 = vsel %vm2393, %v2380, 0
        %vm2397 = vcmask 1043456
        %v2399 = vsel %vm2397, %v2391, 0
        %2401 = vmatprep.subr.mxu0 0.0
        %2402 = vmatpush1.msra.mxu0 %v2381
        %2403 = vmatprep.subr.mxu0 0.0
        %2404 = vmatpush1.msra.mxu0 %v2382
        %2405 = vmatprep.subr.mxu0 0.0
        %2406 = vmatpush1.msra.mxu0 %v2383
        %2407 = vmatprep.subr.mxu0 0.0
        %2408 = vmatpush1.msra.mxu0 %v2384
        %2409 = vmatprep.subr.mxu0 0.0
        %2410 = vmatpush1.msra.mxu0 %v2385
        %2411 = vmatprep.subr.mxu0 0.0
        %2412 = vmatpush1.msra.mxu0 %v2386
        %2413 = vmatprep.subr.mxu0 0.0
        %2414 = vmatpush1.msra.mxu0 %v2387
        %2415 = vmatprep.subr.mxu0 0.0
        %2416 = vmatpush1.msra.mxu0 %v2388
        %2417 = vmatprep.subr.mxu0 0.0
        %2418 = vmatpush1.msra.mxu0 %v2389
        %2419 = vmatprep.subr.mxu0 0.0
        %2420 = vmatpush1.msra.mxu0 %v2390
        %2421 = vmatprep.subr.mxu0 0.0
        %2422 = vmatpush1.msra.mxu0 %v2399
        %2423 = vmatprep.subr.mxu0 0.0
        %2424 = vmatpush1.msra.mxu0 0.0
        %2425 = vmatprep.subr.mxu0 0.0
        %2426 = vmatpush1.msra.mxu0 0.0
        %2427 = vmatprep.subr.mxu0 0.0
        %2428 = vmatpush1.msra.mxu0 0.0
        %2429 = vmatprep.subr.mxu0 0.0
        %2430 = vmatpush1.msra.mxu0 0.0
        %2431 = vmatprep.subr.mxu0 0.0
        %2432 = vmatpush1.msra.mxu0 0.0
        %2433 = vmatprep.subr.mxu0 0.0
        %2434 = vmatpush1.msra.mxu0 0.0
        %2435 = vmatprep.subr.mxu0 0.0
        %2436 = vmatpush1.msra.mxu0 0.0
        %2437 = vmatprep.subr.mxu0 0.0
        %2438 = vmatpush1.msra.mxu0 0.0
        %2439 = vmatprep.subr.mxu0 0.0
        %2440 = vmatpush1.msra.mxu0 0.0
        %2441 = vmatprep.subr.mxu0 0.0
        %2442 = vmatpush1.msra.mxu0 0.0
        %2443 = vmatprep.subr.mxu0 0.0
        %2444 = vmatpush1.msra.mxu0 0.0
        %2445 = vmatprep.subr.mxu0 0.0
        %2446 = vmatpush1.msra.mxu0 0.0
        %2447 = vmatprep.subr.mxu0 0.0
        %2448 = vmatpush1.msra.mxu0 0.0
        %2449 = vmatprep.subr.mxu0 0.0
        %2450 = vmatpush1.msra.mxu0 0.0
        %2451 = vmatprep.subr.mxu0 0.0
        %2452 = vmatpush1.msra.mxu0 0.0
        %2453 = vmatprep.subr.mxu0 0.0
        %2454 = vmatpush1.msra.mxu0 0.0
        %2455 = vmatprep.subr.mxu0 0.0
        %2456 = vmatpush1.msra.mxu0 0.0
        %2457 = vmatprep.subr.mxu0 0.0
        %2458 = vmatpush1.msra.mxu0 0.0
        %2459 = vmatprep.subr.mxu0 0.0
        %2460 = vmatpush1.msra.mxu0 0.0
        %2461 = vmatprep.subr.mxu0 0.0
        %2462 = vmatpush1.msra.mxu0 0.0
        %2463 = vmatprep.subr.mxu0 0.0
        %2464 = vmatpush1.msra.mxu0 0.0
        %2465 = vmatprep.mubr.f32.mxu0 0.0
        %2466 = vmatmul.mubr.f32.gmra.mrb[0].mxu0 %v2395
        %v2467 = vpop.f32.mrb[0].mxu0
        %v2468 = vadd.f32 %v2392, %v2467
        %v2469 = vpop.f32.mrb[0].mxu0
        %2470 = vdwg.mxu0
        %vm2471 = vcmask 204800
        %2472 = vst.msk [vmem:[%s515] sm:$0x1] %vm2471, %v2468
        %s2473 = sand.u32 %s318, 1
        %s2474 = scalar_lea.sflag [#allocation6], %s2473
        %s2475 = sand.u32 %s318, 1
        %s2476 = scalar_lea.vmem [#allocation13], %s2475
        // Predicated region
        $region93: #{net_forward.1} parent=71 // pred_check
          %p2477 = pneg %p328
        $region94: #{net_forward.1} parent=71 // pred_check_branch
          %2479 = sbr.rel (%p2477) target = $region96
        $region95: #{net_forward.1} parent=71 // pred_region
          %s2481 = ssub.s32 16, 16
          %2482 = vsyncadd %s2474, %s2481
          %s2483 = smul.addr %s32, 16
          %s2484 = scalar_lea.hbm %s13, %s2483
          %s2486 = sshll.u32 %s2476, 4
          %s2487 = int_to_ptr.vmem [resolvable:$true] %s2486
          %2489 = dma.vmem_to_hbm [thread:$0]  %s2487, 16, %s2484, %s2474
        $region96: #{net_forward.1} parent=71 // pred_fallthru
          _
      $region72: #{net_forward.1} parent=5 // pred_fallthru
        _
      %p2490 = scmp.le.s32.totalorder 2, %s27
      // Predicated region
      $region97: #{net_forward.1} parent=5 // pred_check
        %p2491 = pneg %p2490
      $region98: #{net_forward.1} parent=5 // pred_check_branch
        %2493 = sbr.rel (%p2491) target = $region100
      $region99: #{net_forward.1} parent=5 // pred_region
        %s2494 = ssub.s32 %s27, 2
        // Predicated region
        $region101: #{net_forward.1} parent=99 // pred_check
          %p2495 = pneg %p334
        $region102: #{net_forward.1} parent=99 // pred_check_branch
          %2497 = sbr.rel (%p2495) target = $region104
        $region103: #{net_forward.1} parent=99 // pred_region
          %s2498 = sand.u32 %s319, 1
          %s2499 = scalar_lea.sflag [#allocation6], %s2498
          %s2500 = sand.u32 %s319, 1
          %s2501 = scalar_lea.vmem [#allocation13], %s2500
          %2502 = dma.done %s2499, 16
        $region104: #{net_forward.1} parent=99 // pred_fallthru
          _
      $region100: #{net_forward.1} parent=5 // pred_fallthru
        _
    $region6: #{net_forward.1} parent=1 // loop_footer
      %s31 = sadd.s32 1, %s27
    $region7: #{net_forward.1} parent=1 // loop_footer_branch
      %26 = sbr.rel target = $region3
    $region8: #{net_forward.1} parent=1 // loop_exit
      _
    %2503 = vsyncpa [#allocation5], 1
    %s2504 = scalar_lea.sflag [#allocation5], 1
    %2505 = vsyncpa %s2504, 1
    %2506 = vsyncpa [#allocation8], 1
    %2507 = vsyncpa [#allocation11], 1
    %2508 = vsyncpa [#allocation6], 1
    %s2509 = scalar_lea.sflag [#allocation6], 1
    %2510 = vsyncpa %s2509, 1

</llo_original>
